<compile_context>
chip_gen: v6e
topology: v6e:2x2x1
jax: 0.10.0
libtpu: 0.0.40
codegen_flags: <defaults>
</compile_context>

<pallas_src>
import functools

import jax
import jax.numpy as jnp
from jax.experimental import pallas as pl
from jax.experimental.pallas import tpu as pltpu


LANE = 128
# Node tiling.  128 is MXU-native on v5e and comfortable on every generation;
# bump to 256 on v6e/v7x for full MXU width on large graphs.
TILE_D = 128   # destination-node rows per tile ("parallel" grid axis)
TILE_S = 128   # source-node columns per tile (reduction axis, last)


def _round_up(n, m):
    return (n + m - 1) // m * m


# ---------------------------------------------------------------------------
# Pallas kernel: one GCN layer, tiled over (dst tile, src tile).
# ---------------------------------------------------------------------------
def _gcn_layer_kernel(a_ref, x_ref, w_ref, b_ref, out_ref, acc_ref, *,
                      apply_relu):
    k = pl.program_id(1)

    @pl.when(k == 0)
    def _():
        acc_ref[...] = jnp.zeros_like(acc_ref)

    # Aggregate: acc += A_hat[dst_tile, src_tile] @ X[src_tile]
    # bf16 x bf16 on the MXU, f32 accumulation in VMEM scratch.
    acc_ref[...] += jnp.dot(a_ref[...], x_ref[...],
                            preferred_element_type=jnp.float32)

    @pl.when(k == pl.num_programs(1) - 1)
    def _():
        # Finalize (once per dst tile): project with W, add bias, activation.
        # This matmul is tiny, so it is kept in f32 to avoid downcasting the
        # f32 accumulator; the epilogue stays f32 (bf16-free VPU path on v5e).
        h = jnp.dot(acc_ref[...], w_ref[...].astype(jnp.float32),
                    preferred_element_type=jnp.float32) + b_ref[...]
        if apply_relu:
            h = jnp.maximum(h, 0.0)
        out_ref[...] = h.astype(out_ref.dtype)


def _gcn_layer(a, x, w, b, *, apply_relu, out_dtype):
    n_pad = a.shape[0]
    f_pad = x.shape[1]
    h_pad = w.shape[1]
    grid = (n_pad // TILE_D, n_pad // TILE_S)

    kernel = functools.partial(_gcn_layer_kernel, apply_relu=apply_relu)
    return pl.pallas_call(
        kernel,
        out_shape=jax.ShapeDtypeStruct((n_pad, h_pad), out_dtype),
        grid_spec=pltpu.PrefetchScalarGridSpec(
            num_scalar_prefetch=0,
            grid=grid,
            in_specs=[
                # Streaming O(N^2) adjacency tile (default depth-2 buffering;
                # sweep pl.Buffered(3) here if DMA is exposed on v5e/v6e).
                pl.BlockSpec((TILE_D, TILE_S), lambda i, k: (i, k)),
                # Source-node feature tile.
                pl.BlockSpec((TILE_S, f_pad), lambda i, k: (k, 0)),
                # Weights / bias: constant index maps -> resident, DMA'd once.
                pl.BlockSpec((f_pad, h_pad), lambda i, k: (0, 0)),
                pl.BlockSpec((1, h_pad), lambda i, k: (0, 0)),
            ],
            out_specs=pl.BlockSpec((TILE_D, h_pad), lambda i, k: (i, 0)),
            scratch_shapes=[pltpu.VMEM((TILE_D, f_pad), jnp.float32)],
        ),
        compiler_params=pltpu.CompilerParams(
            # dst tiles are independent -> "parallel" (feeds both v7x TCs);
            # src axis is the reduction -> "arbitrary" (last).
            dimension_semantics=("parallel", "arbitrary")),
    )(a, x, w, b)


@jax.jit
def dfa_graph_encoder_forward(a_pad, x_pad, w1, b1, w2, b2):
    """Padded, bf16-cast operands in; padded f32 logits out."""
    # conv1 -> ReLU -> DFALayer (identity in forward; feedback-alignment
    # hooks only affect the backward pass).
    h1 = _gcn_layer(a_pad, x_pad, w1, b1,
                    apply_relu=True, out_dtype=jnp.bfloat16)
    # conv2 -> DFA wrapper (identity in forward).
    out = _gcn_layer(a_pad, h1, w2, b2,
                     apply_relu=False, out_dtype=jnp.float32)
    return out


# ---------------------------------------------------------------------------
# Plain-JAX glue: edge list -> dense GCN-normalized adjacency, padding, cast.
# ---------------------------------------------------------------------------
def _gcn_edges_with_self_loops(edge_index, num_nodes):
    src, dst = edge_index[0], edge_index[1]
    loop = jnp.arange(num_nodes, dtype=src.dtype)
    src = jnp.concatenate([src, loop])
    dst = jnp.concatenate([dst, loop])
    deg = jnp.zeros((num_nodes,), jnp.float32).at[dst].add(1.0)
    dinv = jax.lax.rsqrt(deg)            # deg >= 1 because of self-loops
    norm = dinv[src] * dinv[dst]
    return src, dst, norm


def build_normalized_adjacency(edge_index, num_nodes):
    """A_hat[i, j] = sum_{e=(j->i)} deg(j)^-1/2 * deg(i)^-1/2 (self-loops incl.)."""
    src, dst, norm = _gcn_edges_with_self_loops(edge_index, num_nodes)
    return jnp.zeros((num_nodes, num_nodes), jnp.float32).at[dst, src].add(norm)


def prepare_operands(x, edge_index, params):
    """Pad node / feature / channel dims to TPU-friendly sizes; cast to bf16."""
    n, f = x.shape
    h = params["w1"].shape[1]
    c = params["w2"].shape[1]

    n_pad = _round_up(n, max(TILE_D, TILE_S))
    f_pad = _round_up(f, LANE)
    h_pad = _round_up(h, LANE)
    c_pad = _round_up(c, LANE)

    a = build_normalized_adjacency(edge_index, n)
    a_pad = jnp.zeros((n_pad, n_pad), jnp.float32).at[:n, :n].set(a)
    x_pad = jnp.zeros((n_pad, f_pad), jnp.float32).at[:n, :f].set(x)
    w1 = jnp.zeros((f_pad, h_pad), jnp.float32).at[:f, :h].set(params["w1"])
    b1 = jnp.zeros((1, h_pad), jnp.float32).at[0, :h].set(params["b1"])
    w2 = jnp.zeros((h_pad, c_pad), jnp.float32).at[:h, :c].set(params["w2"])
    b2 = jnp.zeros((1, c_pad), jnp.float32).at[0, :c].set(params["b2"])

    bf = jnp.bfloat16
    return (a_pad.astype(bf), x_pad.astype(bf),
            w1.astype(bf), b1, w2.astype(bf), b2)


# ---------------------------------------------------------------------------
# Pure-JAX f32 reference (edge-wise scatter, PyG GCNConv semantics).
# ---------------------------------------------------------------------------
def _gcn_conv_ref(x, src, dst, norm, w, b, num_nodes):
    msg = norm[:, None] * (x @ w)[src]
    out = jnp.zeros((num_nodes, w.shape[1]), jnp.float32).at[dst].add(msg)
    return out + b


def dfa_graph_encoder_ref(x, edge_index, params):
    n = x.shape[0]
    src, dst, norm = _gcn_edges_with_self_loops(edge_index, n)
    h1 = jax.nn.relu(_gcn_conv_ref(x, src, dst, norm,
                                   params["w1"], params["b1"], n))
    return _gcn_conv_ref(h1, src, dst, norm, params["w2"], params["b2"], n)


# ---------------------------------------------------------------------------
# Main
# ---------------------------------------------------------------------------
if __name__ == "__main__":
    num_nodes = 200          # padded to 256 -> a real 2x2 (dst, src) grid
    in_channels = 16
    out_channels = 8
    hidden = 2 * out_channels
    num_edges = 800

    key = jax.random.PRNGKey(0)
    keys = jax.random.split(key, 7)

    # Graph data (data.x, data.edge_index)
    x = jax.random.normal(keys[0], (num_nodes, in_channels), jnp.float32)
    src = jax.random.randint(keys[1], (num_edges,), 0, num_nodes)
    dst = jax.random.randint(keys[2], (num_edges,), 0, num_nodes)
    edge_index = jnp.stack([src, dst], axis=0)                    # [2, E]

    # Deterministic synthetic GCNConv parameters (weight [in, out], bias [out]).
    s1 = 1.0 / jnp.sqrt(jnp.float32(in_channels))
    s2 = 1.0 / jnp.sqrt(jnp.float32(hidden))
    params = {
        "w1": s1 * jax.random.normal(keys[3], (in_channels, hidden), jnp.float32),
        "b1": 0.1 * jax.random.normal(keys[4], (hidden,), jnp.float32),
        "w2": s2 * jax.random.normal(keys[5], (hidden, out_channels), jnp.float32),
        "b2": 0.1 * jax.random.normal(keys[6], (out_channels,), jnp.float32),
    }

    # TODO(synk): for sparse real-world graphs (avg degree << N), replace the
    # dense A_hat with CSR offsets/indices via scalar prefetch and an in-kernel
    # row gather, dropping HBM traffic from O(N^2) to O(E).

    operands = prepare_operands(x, edge_index, params)
    out_pad = dfa_graph_encoder_forward(*operands)
    out_pad = jax.block_until_ready(out_pad)
    out = out_pad[:num_nodes, :out_channels]

    ref = dfa_graph_encoder_ref(x, edge_index, params)
    assert out.shape == (num_nodes, out_channels)
    # bf16 inputs (A_hat, X, W, h1) with f32 accumulation -> loosened tolerance
    # vs. the full-f32 reference.
    assert jnp.allclose(out, ref, atol=1e-1, rtol=1e-1), (
        "mismatch vs JAX reference: max abs err = "
        f"{jnp.max(jnp.abs(out - ref))}")

    print("KERNEL_OK")
</pallas_src>

<mosaic_0001>
module attributes {stable_mosaic.version = 11 : i64} {
  func.func @_gcn_layer_kernel(%arg0: i32, %arg1: i32, %arg2: memref<128x128xbf16, #tpu.memory_space<vmem>>, %arg3: memref<128x128xbf16, #tpu.memory_space<vmem>>, %arg4: memref<128x128xbf16, #tpu.memory_space<vmem>>, %arg5: memref<1x128xf32, #tpu.memory_space<vmem>>, %arg6: memref<128x128xf32, #tpu.memory_space<vmem>>, %arg7: memref<128x128xf32, #tpu.memory_space<vmem>>) attributes {dimension_semantics = [#tpu.dimension_semantics<parallel>, #tpu.dimension_semantics<arbitrary>], iteration_bounds = array<i64: 2, 2>, scalar_prefetch = 0 : i64, scratch_operands = 1 : i64, tpu.core_type = #tpu.core_type<tc>, window_params = [{transform_indices = @transform_0, window_bounds = array<i64: 128, 128>}, {transform_indices = @transform_1, window_bounds = array<i64: 128, 128>}, {pipeline_mode = #tpu.pipeline_mode<synchronous>, transform_indices = @transform_2, window_bounds = array<i64: 128, 128>}, {pipeline_mode = #tpu.pipeline_mode<synchronous>, transform_indices = @transform_3, window_bounds = array<i64: 1, 128>}, {transform_indices = @transform_4, window_bounds = array<i64: 128, 128>}]} {
    %c0_i32 = arith.constant 0 : i32
    %0 = arith.cmpi eq, %arg1, %c0_i32 : i32
    %1 = arith.extui %0 : i1 to i32
    %c0_i32_0 = arith.constant 0 : i32
    %2 = arith.cmpi ne, %1, %c0_i32_0 : i32
    scf.if %2 {
      %cst_9 = arith.constant 0.000000e+00 : f32
      %12 = vector.broadcast %cst_9 : f32 to vector<128x128xf32>
      %c0_10 = arith.constant 0 : index
      %c0_11 = arith.constant 0 : index
      %13 = vector.load %arg7[%c0_10, %c0_11] : memref<128x128xf32, #tpu.memory_space<vmem>>, vector<128x128xf32>
      tpu.vector_store %arg7[%c0_10, %c0_11], %12 {strides = array<i32>} : memref<128x128xf32, #tpu.memory_space<vmem>>, vector<128x128xf32>,
    } else {
    }
    %c0 = arith.constant 0 : index
    %c0_1 = arith.constant 0 : index
    %3 = vector.load %arg7[%c0, %c0_1] : memref<128x128xf32, #tpu.memory_space<vmem>>, vector<128x128xf32>
    %c0_2 = arith.constant 0 : index
    %c0_3 = arith.constant 0 : index
    %4 = vector.load %arg2[%c0_2, %c0_3] : memref<128x128xbf16, #tpu.memory_space<vmem>>, vector<128x128xbf16>
    %c0_4 = arith.constant 0 : index
    %c0_5 = arith.constant 0 : index
    %5 = vector.load %arg3[%c0_4, %c0_5] : memref<128x128xbf16, #tpu.memory_space<vmem>>, vector<128x128xbf16>
    %cst = arith.constant dense<0.000000e+00> : vector<128x128xf32>
    %6 = tpu.matmul %4, %5, %cst {dimension_numbers = #tpu.dot_dimension_numbers<[1], [0], [0], [1], [0, 0, 1, 1], [], []>} : vector<128x128xbf16>, vector<128x128xbf16>, vector<128x128xf32> -> vector<128x128xf32>
    %7 = arith.addf %3, %6 : vector<128x128xf32>
    %c0_6 = arith.constant 0 : index
    %c0_7 = arith.constant 0 : index
    %8 = vector.load %arg7[%c0_6, %c0_7] : memref<128x128xf32, #tpu.memory_space<vmem>>, vector<128x128xf32>
    tpu.vector_store %arg7[%c0_6, %c0_7], %7 {strides = array<i32>} : memref<128x128xf32, #tpu.memory_space<vmem>>, vector<128x128xf32>,
    %c1_i32 = arith.constant 1 : i32
    %9 = arith.cmpi eq, %arg1, %c1_i32 : i32
    %10 = arith.extui %9 : i1 to i32
    %c0_i32_8 = arith.constant 0 : i32
    %11 = arith.cmpi ne, %10, %c0_i32_8 : i32
    scf.if %11 {
      %c0_9 = arith.constant 0 : index
      %c0_10 = arith.constant 0 : index
      %12 = vector.load %arg7[%c0_9, %c0_10] : memref<128x128xf32, #tpu.memory_space<vmem>>, vector<128x128xf32>
      %c0_11 = arith.constant 0 : index
      %c0_12 = arith.constant 0 : index
      %13 = vector.load %arg4[%c0_11, %c0_12] : memref<128x128xbf16, #tpu.memory_space<vmem>>, vector<128x128xbf16>
      %14 = arith.extf %13 : vector<128x128xbf16> to vector<128x128xf32>
      %cst_13 = arith.constant dense<0.000000e+00> : vector<128x128xf32>
      %15 = tpu.matmul %12, %14, %cst_13 {dimension_numbers = #tpu.dot_dimension_numbers<[1], [0], [0], [1], [0, 0, 1, 1], [], []>} : vector<128x128xf32>, vector<128x128xf32>, vector<128x128xf32> -> vector<128x128xf32>
      %c0_14 = arith.constant 0 : index
      %c0_15 = arith.constant 0 : index
      %16 = vector.load %arg5[%c0_14, %c0_15] : memref<1x128xf32, #tpu.memory_space<vmem>>, vector<1x128xf32>
      %17 = vector.broadcast %16 : vector<1x128xf32> to vector<128x128xf32>
      %18 = arith.addf %15, %17 : vector<128x128xf32>
      %c0_16 = arith.constant 0 : index
      %c0_17 = arith.constant 0 : index
      %19 = vector.load %arg6[%c0_16, %c0_17] : memref<128x128xf32, #tpu.memory_space<vmem>>, vector<128x128xf32>
      tpu.vector_store %arg6[%c0_16, %c0_17], %18 {strides = array<i32>} : memref<128x128xf32, #tpu.memory_space<vmem>>, vector<128x128xf32>,
    } else {
    }
    return
  }
  func.func @transform_0(%arg0: i32, %arg1: i32) -> (i32, i32) {
    %c0_i32 = arith.constant 0 : i32
    return %arg0, %arg1 : i32, i32
  }
  func.func @transform_1(%arg0: i32, %arg1: i32) -> (i32, i32) {
    %c0_i32 = arith.constant 0 : i32
    %c0_i32_0 = arith.constant 0 : i32
    return %arg1, %c0_i32 : i32, i32
  }
  func.func @transform_2(%arg0: i32, %arg1: i32) -> (i32, i32) {
    %c0_i32 = arith.constant 0 : i32
    %c0_i32_0 = arith.constant 0 : i32
    %c0_i32_1 = arith.constant 0 : i32
    return %c0_i32, %c0_i32_0 : i32, i32
  }
  func.func @transform_3(%arg0: i32, %arg1: i32) -> (i32, i32) {
    %c0_i32 = arith.constant 0 : i32
    %c0_i32_0 = arith.constant 0 : i32
    %c0_i32_1 = arith.constant 0 : i32
    return %c0_i32, %c0_i32_0 : i32, i32
  }
  func.func @transform_4(%arg0: i32, %arg1: i32) -> (i32, i32) {
    %c0_i32 = arith.constant 0 : i32
    %c0_i32_0 = arith.constant 0 : i32
    return %arg0, %c0_i32 : i32, i32
  }
}

module attributes {stable_mosaic.version = 11 : i64} {
  func.func @_gcn_layer_kernel(%arg0: i32, %arg1: i32, %arg2: memref<128x128xbf16, #tpu.memory_space<vmem>>, %arg3: memref<128x128xbf16, #tpu.memory_space<vmem>>, %arg4: memref<128x128xbf16, #tpu.memory_space<vmem>>, %arg5: memref<1x128xf32, #tpu.memory_space<vmem>>, %arg6: memref<128x128xbf16, #tpu.memory_space<vmem>>, %arg7: memref<128x128xf32, #tpu.memory_space<vmem>>) attributes {dimension_semantics = [#tpu.dimension_semantics<parallel>, #tpu.dimension_semantics<arbitrary>], iteration_bounds = array<i64: 2, 2>, scalar_prefetch = 0 : i64, scratch_operands = 1 : i64, tpu.core_type = #tpu.core_type<tc>, window_params = [{transform_indices = @transform_0, window_bounds = array<i64: 128, 128>}, {transform_indices = @transform_1, window_bounds = array<i64: 128, 128>}, {pipeline_mode = #tpu.pipeline_mode<synchronous>, transform_indices = @transform_2, window_bounds = array<i64: 128, 128>}, {pipeline_mode = #tpu.pipeline_mode<synchronous>, transform_indices = @transform_3, window_bounds = array<i64: 1, 128>}, {transform_indices = @transform_4, window_bounds = array<i64: 128, 128>}]} {
    %c0_i32 = arith.constant 0 : i32
    %0 = arith.cmpi eq, %arg1, %c0_i32 : i32
    %1 = arith.extui %0 : i1 to i32
    %c0_i32_0 = arith.constant 0 : i32
    %2 = arith.cmpi ne, %1, %c0_i32_0 : i32
    scf.if %2 {
      %cst_9 = arith.constant 0.000000e+00 : f32
      %12 = vector.broadcast %cst_9 : f32 to vector<128x128xf32>
      %c0_10 = arith.constant 0 : index
      %c0_11 = arith.constant 0 : index
      %13 = vector.load %arg7[%c0_10, %c0_11] : memref<128x128xf32, #tpu.memory_space<vmem>>, vector<128x128xf32>
      tpu.vector_store %arg7[%c0_10, %c0_11], %12 {strides = array<i32>} : memref<128x128xf32, #tpu.memory_space<vmem>>, vector<128x128xf32>,
    } else {
    }
    %c0 = arith.constant 0 : index
    %c0_1 = arith.constant 0 : index
    %3 = vector.load %arg7[%c0, %c0_1] : memref<128x128xf32, #tpu.memory_space<vmem>>, vector<128x128xf32>
    %c0_2 = arith.constant 0 : index
    %c0_3 = arith.constant 0 : index
    %4 = vector.load %arg2[%c0_2, %c0_3] : memref<128x128xbf16, #tpu.memory_space<vmem>>, vector<128x128xbf16>
    %c0_4 = arith.constant 0 : index
    %c0_5 = arith.constant 0 : index
    %5 = vector.load %arg3[%c0_4, %c0_5] : memref<128x128xbf16, #tpu.memory_space<vmem>>, vector<128x128xbf16>
    %cst = arith.constant dense<0.000000e+00> : vector<128x128xf32>
    %6 = tpu.matmul %4, %5, %cst {dimension_numbers = #tpu.dot_dimension_numbers<[1], [0], [0], [1], [0, 0, 1, 1], [], []>} : vector<128x128xbf16>, vector<128x128xbf16>, vector<128x128xf32> -> vector<128x128xf32>
    %7 = arith.addf %3, %6 : vector<128x128xf32>
    %c0_6 = arith.constant 0 : index
    %c0_7 = arith.constant 0 : index
    %8 = vector.load %arg7[%c0_6, %c0_7] : memref<128x128xf32, #tpu.memory_space<vmem>>, vector<128x128xf32>
    tpu.vector_store %arg7[%c0_6, %c0_7], %7 {strides = array<i32>} : memref<128x128xf32, #tpu.memory_space<vmem>>, vector<128x128xf32>,
    %c1_i32 = arith.constant 1 : i32
    %9 = arith.cmpi eq, %arg1, %c1_i32 : i32
    %10 = arith.extui %9 : i1 to i32
    %c0_i32_8 = arith.constant 0 : i32
    %11 = arith.cmpi ne, %10, %c0_i32_8 : i32
    scf.if %11 {
      %c0_9 = arith.constant 0 : index
      %c0_10 = arith.constant 0 : index
      %12 = vector.load %arg7[%c0_9, %c0_10] : memref<128x128xf32, #tpu.memory_space<vmem>>, vector<128x128xf32>
      %c0_11 = arith.constant 0 : index
      %c0_12 = arith.constant 0 : index
      %13 = vector.load %arg4[%c0_11, %c0_12] : memref<128x128xbf16, #tpu.memory_space<vmem>>, vector<128x128xbf16>
      %14 = arith.extf %13 : vector<128x128xbf16> to vector<128x128xf32>
      %cst_13 = arith.constant dense<0.000000e+00> : vector<128x128xf32>
      %15 = tpu.matmul %12, %14, %cst_13 {dimension_numbers = #tpu.dot_dimension_numbers<[1], [0], [0], [1], [0, 0, 1, 1], [], []>} : vector<128x128xf32>, vector<128x128xf32>, vector<128x128xf32> -> vector<128x128xf32>
      %c0_14 = arith.constant 0 : index
      %c0_15 = arith.constant 0 : index
      %16 = vector.load %arg5[%c0_14, %c0_15] : memref<1x128xf32, #tpu.memory_space<vmem>>, vector<1x128xf32>
      %17 = vector.broadcast %16 : vector<1x128xf32> to vector<128x128xf32>
      %18 = arith.addf %15, %17 : vector<128x128xf32>
      %cst_16 = arith.constant 0.000000e+00 : f32
      %19 = vector.broadcast %cst_16 : f32 to vector<128x128xf32>
      %20 = arith.maximumf %18, %19 : vector<128x128xf32>
      %21 = arith.truncf %20 : vector<128x128xf32> to vector<128x128xbf16>
      %c0_17 = arith.constant 0 : index
      %c0_18 = arith.constant 0 : index
      %22 = vector.load %arg6[%c0_17, %c0_18] : memref<128x128xbf16, #tpu.memory_space<vmem>>, vector<128x128xbf16>
      tpu.vector_store %arg6[%c0_17, %c0_18], %21 {strides = array<i32>} : memref<128x128xbf16, #tpu.memory_space<vmem>>, vector<128x128xbf16>,
    } else {
    }
    return
  }
  func.func @transform_0(%arg0: i32, %arg1: i32) -> (i32, i32) {
    %c0_i32 = arith.constant 0 : i32
    return %arg0, %arg1 : i32, i32
  }
  func.func @transform_1(%arg0: i32, %arg1: i32) -> (i32, i32) {
    %c0_i32 = arith.constant 0 : i32
    %c0_i32_0 = arith.constant 0 : i32
    return %arg1, %c0_i32 : i32, i32
  }
  func.func @transform_2(%arg0: i32, %arg1: i32) -> (i32, i32) {
    %c0_i32 = arith.constant 0 : i32
    %c0_i32_0 = arith.constant 0 : i32
    %c0_i32_1 = arith.constant 0 : i32
    return %c0_i32, %c0_i32_0 : i32, i32
  }
  func.func @transform_3(%arg0: i32, %arg1: i32) -> (i32, i32) {
    %c0_i32 = arith.constant 0 : i32
    %c0_i32_0 = arith.constant 0 : i32
    %c0_i32_1 = arith.constant 0 : i32
    return %c0_i32, %c0_i32_0 : i32, i32
  }
  func.func @transform_4(%arg0: i32, %arg1: i32) -> (i32, i32) {
    %c0_i32 = arith.constant 0 : i32
    %c0_i32_0 = arith.constant 0 : i32
    return %arg0, %c0_i32 : i32, i32
  }
}

</mosaic_0001>

<llo_original>
// kernel: dfa_graph_encoder_forward.3
$region0: #{dfa_graph_encoder_forward.3}
  #allocation0 [shape = 'u32[]', space=smem, size = 0x4, offset = 0x4, fixed_abs, tag = 'smem constant byte address 0x4 - core index']
  #allocation1 [shape = 'u32[144,128]{1,0:T(1,128)}', space=vmem, size = 0x12000, scoped, tag = 'internal scratch']
  #allocation2 [shape = 'f32[128,128]{1,0:T(8,128)}', space=vmem, size = 0x10000, scoped, tag = 'scratch operand']
  %s0 = inlined_call_operand.vmem [shape: bf16[256,256], index: 0, kind: input, shape index: {}]
  %s1 = inlined_call_operand.vmem [shape: bf16[256,128], index: 1, kind: input, shape index: {}]
  %s2 = inlined_call_operand.vmem [shape: bf16[128,128], index: 2, kind: input, shape index: {}]
  %s3 = inlined_call_operand.vmem [shape: f32[1,128], index: 3, kind: input, shape index: {}]
  %s4 = inlined_call_operand.hbm [shape: f32[256,128], index: 4, kind: output, shape index: {}]
  %s5 = sld [smem:[#allocation0]]
  $region98: #{dfa_graph_encoder_forward.3} parent=0
    _
  %s7 = ssub.s32 1, %s5
  %s8 = scalar_select 0, %s7, %s5
  $region1: #{dfa_graph_encoder_forward.3} parent=0
    #allocation3 [shape = 'u8[65536]{0}', space=vmem, size = 0x10000, scoped, tag = 'input window, operand 0']
    #allocation4 [shape = 'u8[131072]{0}', space=vmem, size = 0x20000, scoped, tag = 'output window, operand 0']
    #allocation5 [shape = 's32[2]{0}', space=sflag, size = 0x8, scoped, tag = 'scoped memory for dfa_graph_encoder_forward.3']
    %9 = vsyncpa [#allocation5], 0
    %s10 = scalar_lea.sflag [#allocation5], 1
    %11 = vsyncpa %s10, 0
    loop: start=0, step=1, limit=6
    $region2: #{dfa_graph_encoder_forward.3} parent=1 // loop_pre_header
      _
    $region3: #{dfa_graph_encoder_forward.3} parent=1 // loop_header
      %s13 = sphi 0, %s17
      %p14 = scmp.ge.s32.totalorder %s13, 6
      %s20 = sphi 0, %s32
      %s21 = sphi 0, %s28
      %s22 = sphi 0, %s20
      %s23 = sphi 0, %s21
      %s24 = sphi 0, %s22
      %s25 = sphi 0, %s23
      %s37 = sphi 0, %s39
      %s40 = sphi 0, %s37
      %s41 = sphi 0, %s40
      %s57 = sphi 0, %s41
      %s63 = sphi 0, %s65
      %s66 = sphi 0, %s63
      %s67 = sphi 0, %s66
      %s83 = sphi 0, %s67
      %s87 = sphi 0, %s87
      %s89 = sphi 0, %s87
      %s90 = sphi 0, %s89
      %s104 = sphi 0, %s90
      %s108 = sphi 0, %s108
      %s110 = sphi 0, %s108
      %s111 = sphi 0, %s110
      %s125 = sphi 0, %s111
      %s131 = sphi 0, %s133
      %s134 = sphi 0, %s131
      %s135 = sphi 0, %s134
      %s151 = sphi 0, %s135
    $region4: #{dfa_graph_encoder_forward.3} parent=1 // loop_header_branch
      %16 = sbr.rel (%p14) target = $region8
    $region5: #{dfa_graph_encoder_forward.3} parent=1 // loop_body
      %s18 = ssub.s32 %s13, 1
      %s19 = ssub.s32 %s13, 2
      %s26 = sadd.s32 1, %s21
      %p27 = scmp.ge.s32.totalorder %s26, 2
      %s28 = scalar_select %p27, 0, %s26
      %s29 = sadd.s32 1, %s20
      %s30 = scalar_select %p27, %s29, %s20
      %p31 = scmp.ge.s32.totalorder %s30, 2
      %s32 = scalar_select %p31, 0, %s30
      %s33 = ssub.s32 %s20, %s32
      %s34 = ssub.s32 %s21, %s28
      %s35 = sor.u32 %s33, %s34
      %p36 = scmp.eq.s32.totalorder %s35, 0
      %s38 = sadd.s32 %s37, 1
      %s39 = scalar_select %p36, %s37, %s38
      %p42 = pneg %p36
      %p43 = scmp.eq.s32.totalorder %s13, 3
      %p44 = por %p42, %p43
      %p45 = scmp.ne.s32.totalorder %s37, %s40
      %p46 = scmp.eq.s32.totalorder %s13, 0
      %p47 = por %p45, %p46
      %p48 = scmp.ne.s32.totalorder %s37, %s40
      %p49 = scmp.eq.s32.totalorder %s18, 3
      %p50 = por %p48, %p49
      %p51 = scmp.ne.s32.totalorder %s40, %s41
      %p52 = scmp.eq.s32.totalorder %s18, 0
      %p53 = por %p51, %p52
      %p54 = scmp.ne.s32.totalorder %s40, %s41
      %p55 = scmp.eq.s32.totalorder %s19, 3
      %p56 = por %p54, %p55
      %p58 = scmp.ne.s32.totalorder %s41, %s57
      %p59 = scmp.eq.s32.totalorder %s19, 0
      %p60 = por %p58, %p59
      %s61 = ssub.s32 %s21, %s28
      %p62 = scmp.eq.s32.totalorder %s61, 0
      %s64 = sadd.s32 %s63, 1
      %s65 = scalar_select %p62, %s63, %s64
      %p68 = pneg %p62
      %p69 = scmp.eq.s32.totalorder %s13, 3
      %p70 = por %p68, %p69
      %p71 = scmp.ne.s32.totalorder %s63, %s66
      %p72 = scmp.eq.s32.totalorder %s13, 0
      %p73 = por %p71, %p72
      %p74 = scmp.ne.s32.totalorder %s63, %s66
      %p75 = scmp.eq.s32.totalorder %s18, 3
      %p76 = por %p74, %p75
      %p77 = scmp.ne.s32.totalorder %s66, %s67
      %p78 = scmp.eq.s32.totalorder %s18, 0
      %p79 = por %p77, %p78
      %p80 = scmp.ne.s32.totalorder %s66, %s67
      %p81 = scmp.eq.s32.totalorder %s19, 3
      %p82 = por %p80, %p81
      %p84 = scmp.ne.s32.totalorder %s67, %s83
      %p85 = scmp.eq.s32.totalorder %s19, 0
      %p86 = por %p84, %p85
      %s88 = sadd.s32 %s87, 1
      %p91 = scmp.eq.s32.totalorder %s13, 3
      %p92 = scmp.ne.s32.totalorder %s87, %s89
      %p93 = scmp.eq.s32.totalorder %s13, 0
      %p94 = por %p92, %p93
      %p95 = scmp.ne.s32.totalorder %s87, %s89
      %p96 = scmp.eq.s32.totalorder %s18, 3
      %p97 = por %p95, %p96
      %p98 = scmp.ne.s32.totalorder %s89, %s90
      %p99 = scmp.eq.s32.totalorder %s18, 0
      %p100 = por %p98, %p99
      %p101 = scmp.ne.s32.totalorder %s89, %s90
      %p102 = scmp.eq.s32.totalorder %s19, 3
      %p103 = por %p101, %p102
      %p105 = scmp.ne.s32.totalorder %s90, %s104
      %p106 = scmp.eq.s32.totalorder %s19, 0
      %p107 = por %p105, %p106
      %s109 = sadd.s32 %s108, 1
      %p112 = scmp.eq.s32.totalorder %s13, 3
      %p113 = scmp.ne.s32.totalorder %s108, %s110
      %p114 = scmp.eq.s32.totalorder %s13, 0
      %p115 = por %p113, %p114
      %p116 = scmp.ne.s32.totalorder %s108, %s110
      %p117 = scmp.eq.s32.totalorder %s18, 3
      %p118 = por %p116, %p117
      %p119 = scmp.ne.s32.totalorder %s110, %s111
      %p120 = scmp.eq.s32.totalorder %s18, 0
      %p121 = por %p119, %p120
      %p122 = scmp.ne.s32.totalorder %s110, %s111
      %p123 = scmp.eq.s32.totalorder %s19, 3
      %p124 = por %p122, %p123
      %p126 = scmp.ne.s32.totalorder %s111, %s125
      %p127 = scmp.eq.s32.totalorder %s19, 0
      %p128 = por %p126, %p127
      %s129 = ssub.s32 %s20, %s32
      %p130 = scmp.eq.s32.totalorder %s129, 0
      %s132 = sadd.s32 %s131, 1
      %s133 = scalar_select %p130, %s131, %s132
      %p136 = pneg %p130
      %p137 = scmp.eq.s32.totalorder %s13, 3
      %p138 = por %p136, %p137
      %p139 = scmp.ne.s32.totalorder %s131, %s134
      %p140 = scmp.eq.s32.totalorder %s13, 0
      %p141 = por %p139, %p140
      %p142 = scmp.ne.s32.totalorder %s131, %s134
      %p143 = scmp.eq.s32.totalorder %s18, 3
      %p144 = por %p142, %p143
      %p145 = scmp.ne.s32.totalorder %s134, %s135
      %p146 = scmp.eq.s32.totalorder %s18, 0
      %p147 = por %p145, %p146
      %p148 = scmp.ne.s32.totalorder %s134, %s135
      %p149 = scmp.eq.s32.totalorder %s19, 3
      %p150 = por %p148, %p149
      %p152 = scmp.ne.s32.totalorder %s135, %s151
      %p153 = scmp.eq.s32.totalorder %s19, 0
      %p154 = por %p152, %p153
      %p155 = scmp.le.s32.totalorder 1, %s13
      %p156 = scmp.lt.s32.totalorder %s13, 5
      %p157 = pnand %p155, %p156
      %p158 = pneg %p157
      // Predicated region
      $region9: #{dfa_graph_encoder_forward.3} parent=5 // pred_check
        _
      $region10: #{dfa_graph_encoder_forward.3} parent=5 // pred_check_branch
        %160 = sbr.rel (%p157) target = $region12
      $region11: #{dfa_graph_encoder_forward.3} parent=5 // pred_region
        %s161 = ssub.s32 %s13, 1
        // Predicated region
        $region13: #{dfa_graph_encoder_forward.3} parent=11 // pred_check
          %p162 = pneg %p100
        $region14: #{dfa_graph_encoder_forward.3} parent=11 // pred_check_branch
          %164 = sbr.rel (%p162) target = $region16
        $region15: #{dfa_graph_encoder_forward.3} parent=11 // pred_region
          _
        $region16: #{dfa_graph_encoder_forward.3} parent=11 // pred_fallthru
          _
        // Predicated region
        $region17: #{dfa_graph_encoder_forward.3} parent=11 // pred_check
          %p165 = pneg %p121
        $region18: #{dfa_graph_encoder_forward.3} parent=11 // pred_check_branch
          %167 = sbr.rel (%p165) target = $region20
        $region19: #{dfa_graph_encoder_forward.3} parent=11 // pred_region
          _
        $region20: #{dfa_graph_encoder_forward.3} parent=11 // pred_fallthru
          _
      $region12: #{dfa_graph_encoder_forward.3} parent=5 // pred_fallthru
        _
      %p168 = scmp.lt.s32.totalorder %s13, 4
      // Predicated region
      $region21: #{dfa_graph_encoder_forward.3} parent=5 // pred_check
        %p169 = pneg %p168
      $region22: #{dfa_graph_encoder_forward.3} parent=5 // pred_check_branch
        %171 = sbr.rel (%p169) target = $region24
      $region23: #{dfa_graph_encoder_forward.3} parent=5 // pred_region
        // Predicated region
        $region25: #{dfa_graph_encoder_forward.3} parent=23 // pred_check
          %p172 = pneg %p47
        $region26: #{dfa_graph_encoder_forward.3} parent=23 // pred_check_branch
          %174 = sbr.rel (%p172) target = $region28
        $region27: #{dfa_graph_encoder_forward.3} parent=23 // pred_region
          %s175 = sand.u32 %s37, 1
          %s176 = sand.u32 %s37, 1
          %s177 = smul.addr %s176, 64
          %s178 = scalar_lea.vmem [#allocation3], %s177
          %s179 = smul.u32 16, %s20
          %s180 = smul.addr %s179, 2
          %s181 = sadd.s32 %s21, %s180
          %s182 = smul.addr %s181, 4
          %s183 = scalar_lea.vmem %s0, %s182
          // Predicated region
          $region29: #{dfa_graph_encoder_forward.3} parent=27 // pred_check
            _
          $region30: #{dfa_graph_encoder_forward.3} parent=27 // pred_check_branch
            %185 = sbr.rel (0) target = $region32
          $region31: #{dfa_graph_encoder_forward.3} parent=27 // pred_region
            // Predicated region
            $region33: #{dfa_graph_encoder_forward.3} parent=31 // pred_check
              _
            $region34: #{dfa_graph_encoder_forward.3} parent=31 // pred_check_branch
              %187 = sbr.rel target = $region36
            $region35: #{dfa_graph_encoder_forward.3} parent=31 // pred_region
              // Predicated region
              $region48: #{dfa_graph_encoder_forward.3} parent=35 // pred_check
                _
              $region49: #{dfa_graph_encoder_forward.3} parent=35 // pred_check_branch
                %233 = sbr.rel (0) target = $region51
              $region50: #{dfa_graph_encoder_forward.3} parent=35 // pred_region
                loop: start=0, step=1, limit=1
                $region52: #{dfa_graph_encoder_forward.3} parent=50 // loop_pre_header
                  _
                $region53: #{dfa_graph_encoder_forward.3} parent=50 // loop_header
                  %s235 = sphi 0, %s239
                  %p236 = scmp.ge.s32.totalorder %s235, 1
                  %s240 = sphi %s183, %s183
                  %s241 = sphi %s178, %s178
                $region54: #{dfa_graph_encoder_forward.3} parent=50 // loop_header_branch
                  %238 = sbr.rel (%p236) target = $region58
                $region55: #{dfa_graph_encoder_forward.3} parent=50 // loop_body
                  _
                $region56: #{dfa_graph_encoder_forward.3} parent=50 // loop_footer
                  %s239 = sadd.s32 1, %s235
                $region57: #{dfa_graph_encoder_forward.3} parent=50 // loop_footer_branch
                  %234 = sbr.rel target = $region53
                $region58: #{dfa_graph_encoder_forward.3} parent=50 // loop_exit
                  _
                %s243 = ssub.s32 16, 1
                loop: start=0, step=1, limit=1
                $region59: #{dfa_graph_encoder_forward.3} parent=50 // loop_pre_header
                  _
                $region60: #{dfa_graph_encoder_forward.3} parent=50 // loop_header
                  %s245 = sphi 0, %s249
                  %p246 = scmp.ge.s32.totalorder %s245, 1
                  %s250 = sphi %s183, %s183
                  %s251 = sphi %s178, %s178
                $region61: #{dfa_graph_encoder_forward.3} parent=50 // loop_header_branch
                  %248 = sbr.rel (%p246) target = $region65
                $region62: #{dfa_graph_encoder_forward.3} parent=50 // loop_body
                  %v252 = vld [vmem:[%s250] sm:%s243]
                  %253 = vst [vmem:[%s251] sm:%s243] %v252
                  %v254 = vld [vmem:[%s250 + $0x8] sm:%s243]
                  %255 = vst [vmem:[%s251 + $0x4] sm:%s243] %v254
                  %v256 = vld [vmem:[%s250 + $0x10] sm:%s243]
                  %257 = vst [vmem:[%s251 + $0x8] sm:%s243] %v256
                  %v258 = vld [vmem:[%s250 + $0x18] sm:%s243]
                  %259 = vst [vmem:[%s251 + $0xc] sm:%s243] %v258
                  %v260 = vld [vmem:[%s250 + $0x20] sm:%s243]
                  %261 = vst [vmem:[%s251 + $0x10] sm:%s243] %v260
                  %v262 = vld [vmem:[%s250 + $0x28] sm:%s243]
                  %263 = vst [vmem:[%s251 + $0x14] sm:%s243] %v262
                  %v264 = vld [vmem:[%s250 + $0x30] sm:%s243]
                  %265 = vst [vmem:[%s251 + $0x18] sm:%s243] %v264
                  %v266 = vld [vmem:[%s250 + $0x38] sm:%s243]
                  %267 = vst [vmem:[%s251 + $0x1c] sm:%s243] %v266
                  %v268 = vld [vmem:[%s250 + $0x40] sm:%s243]
                  %269 = vst [vmem:[%s251 + $0x20] sm:%s243] %v268
                  %v270 = vld [vmem:[%s250 + $0x48] sm:%s243]
                  %271 = vst [vmem:[%s251 + $0x24] sm:%s243] %v270
                  %v272 = vld [vmem:[%s250 + $0x50] sm:%s243]
                  %273 = vst [vmem:[%s251 + $0x28] sm:%s243] %v272
                  %v274 = vld [vmem:[%s250 + $0x58] sm:%s243]
                  %275 = vst [vmem:[%s251 + $0x2c] sm:%s243] %v274
                  %v276 = vld [vmem:[%s250 + $0x60] sm:%s243]
                  %277 = vst [vmem:[%s251 + $0x30] sm:%s243] %v276
                  %v278 = vld [vmem:[%s250 + $0x68] sm:%s243]
                  %279 = vst [vmem:[%s251 + $0x34] sm:%s243] %v278
                  %v280 = vld [vmem:[%s250 + $0x70] sm:%s243]
                  %281 = vst [vmem:[%s251 + $0x38] sm:%s243] %v280
                  %v282 = vld [vmem:[%s250 + $0x78] sm:%s243]
                  %283 = vst [vmem:[%s251 + $0x3c] sm:%s243] %v282
                $region63: #{dfa_graph_encoder_forward.3} parent=50 // loop_footer
                  %s249 = sadd.s32 1, %s245
                $region64: #{dfa_graph_encoder_forward.3} parent=50 // loop_footer_branch
                  %244 = sbr.rel target = $region60
                $region65: #{dfa_graph_encoder_forward.3} parent=50 // loop_exit
                  _
              $region51: #{dfa_graph_encoder_forward.3} parent=35 // pred_fallthru
                _
            $region36: #{dfa_graph_encoder_forward.3} parent=31 // pred_fallthru
              _
            // Predicated region
            $region37: #{dfa_graph_encoder_forward.3} parent=31 // pred_check
              _
            $region38: #{dfa_graph_encoder_forward.3} parent=31 // pred_check_branch
              %189 = sbr.rel (0) target = $region40
            $region39: #{dfa_graph_encoder_forward.3} parent=31 // pred_region
              %s191 = ssub.s32 16, 1
              loop: start=0, step=1, limit=1
              $region41: #{dfa_graph_encoder_forward.3} parent=39 // loop_pre_header
                _
              $region42: #{dfa_graph_encoder_forward.3} parent=39 // loop_header
                %s193 = sphi 0, %s197
                %p194 = scmp.ge.s32.totalorder %s193, 1
                %s198 = sphi %s183, %s183
                %s199 = sphi %s178, %s178
              $region43: #{dfa_graph_encoder_forward.3} parent=39 // loop_header_branch
                %196 = sbr.rel (%p194) target = $region47
              $region44: #{dfa_graph_encoder_forward.3} parent=39 // loop_body
                %v200 = vld [vmem:[%s198] sm:%s191]
                %201 = vst [vmem:[%s199] sm:%s191] %v200
                %v202 = vld [vmem:[%s198 + $0x8] sm:%s191]
                %203 = vst [vmem:[%s199 + $0x4] sm:%s191] %v202
                %v204 = vld [vmem:[%s198 + $0x10] sm:%s191]
                %205 = vst [vmem:[%s199 + $0x8] sm:%s191] %v204
                %v206 = vld [vmem:[%s198 + $0x18] sm:%s191]
                %207 = vst [vmem:[%s199 + $0xc] sm:%s191] %v206
                %v208 = vld [vmem:[%s198 + $0x20] sm:%s191]
                %209 = vst [vmem:[%s199 + $0x10] sm:%s191] %v208
                %v210 = vld [vmem:[%s198 + $0x28] sm:%s191]
                %211 = vst [vmem:[%s199 + $0x14] sm:%s191] %v210
                %v212 = vld [vmem:[%s198 + $0x30] sm:%s191]
                %213 = vst [vmem:[%s199 + $0x18] sm:%s191] %v212
                %v214 = vld [vmem:[%s198 + $0x38] sm:%s191]
                %215 = vst [vmem:[%s199 + $0x1c] sm:%s191] %v214
                %v216 = vld [vmem:[%s198 + $0x40] sm:%s191]
                %217 = vst [vmem:[%s199 + $0x20] sm:%s191] %v216
                %v218 = vld [vmem:[%s198 + $0x48] sm:%s191]
                %219 = vst [vmem:[%s199 + $0x24] sm:%s191] %v218
                %v220 = vld [vmem:[%s198 + $0x50] sm:%s191]
                %221 = vst [vmem:[%s199 + $0x28] sm:%s191] %v220
                %v222 = vld [vmem:[%s198 + $0x58] sm:%s191]
                %223 = vst [vmem:[%s199 + $0x2c] sm:%s191] %v222
                %v224 = vld [vmem:[%s198 + $0x60] sm:%s191]
                %225 = vst [vmem:[%s199 + $0x30] sm:%s191] %v224
                %v226 = vld [vmem:[%s198 + $0x68] sm:%s191]
                %227 = vst [vmem:[%s199 + $0x34] sm:%s191] %v226
                %v228 = vld [vmem:[%s198 + $0x70] sm:%s191]
                %229 = vst [vmem:[%s199 + $0x38] sm:%s191] %v228
                %v230 = vld [vmem:[%s198 + $0x78] sm:%s191]
                %231 = vst [vmem:[%s199 + $0x3c] sm:%s191] %v230
              $region45: #{dfa_graph_encoder_forward.3} parent=39 // loop_footer
                %s197 = sadd.s32 1, %s193
              $region46: #{dfa_graph_encoder_forward.3} parent=39 // loop_footer_branch
                %192 = sbr.rel target = $region42
              $region47: #{dfa_graph_encoder_forward.3} parent=39 // loop_exit
                _
            $region40: #{dfa_graph_encoder_forward.3} parent=31 // pred_fallthru
              _
          $region32: #{dfa_graph_encoder_forward.3} parent=27 // pred_fallthru
            _
          %284 = vnop
        $region28: #{dfa_graph_encoder_forward.3} parent=23 // pred_fallthru
          _
        // Predicated region
        $region66: #{dfa_graph_encoder_forward.3} parent=23 // pred_check
          %p285 = pneg %p73
        $region67: #{dfa_graph_encoder_forward.3} parent=23 // pred_check_branch
          %287 = sbr.rel (%p285) target = $region69
        $region68: #{dfa_graph_encoder_forward.3} parent=23 // pred_region
          %s288 = smul.u32 16, %s21
          %p289 = scmp.lt.s32.totalorder %s288, 31
          %s290 = scalar_select %p289, %s288, 31
          %s291 = smul.addr %s290, 4
          %s292 = scalar_lea.vmem %s1, %s291
          %s293 = smul.u32 16, %s21
        $region69: #{dfa_graph_encoder_forward.3} parent=23 // pred_fallthru
          _
      $region24: #{dfa_graph_encoder_forward.3} parent=5 // pred_fallthru
        _
      %p294 = scmp.le.s32.totalorder 1, %s13
      %p295 = scmp.lt.s32.totalorder %s13, 5
      %p296 = pnand %p294, %p295
      %p297 = pneg %p296
      // Predicated region
      $region70: #{dfa_graph_encoder_forward.3} parent=5 // pred_check
        _
      $region71: #{dfa_graph_encoder_forward.3} parent=5 // pred_check_branch
        %299 = sbr.rel (%p296) target = $region73
      $region72: #{dfa_graph_encoder_forward.3} parent=5 // pred_region
        %s300 = ssub.s32 %s13, 1
        %s301 = sand.u32 %s40, 1
        %s302 = sand.u32 %s40, 1
        %s303 = smul.addr %s302, 64
        %s304 = scalar_lea.vmem [#allocation3], %s303
        // Predicated region
        $region74: #{dfa_graph_encoder_forward.3} parent=72 // pred_check
          %p305 = pneg %p53
        $region75: #{dfa_graph_encoder_forward.3} parent=72 // pred_check_branch
          %307 = sbr.rel (%p305) target = $region77
        $region76: #{dfa_graph_encoder_forward.3} parent=72 // pred_region
          _
        $region77: #{dfa_graph_encoder_forward.3} parent=72 // pred_fallthru
          _
        %s308 = sand.u32 %s40, 1
        %s309 = sand.u32 %s40, 1
        %s310 = smul.addr %s309, 64
        %s311 = scalar_lea.vmem [#allocation3], %s310
        %p312 = pneg %p53
        %p313 = pneg %p50
        %s314 = smul.u32 16, %s23
        %p315 = scmp.lt.s32.totalorder %s314, 31
        %s316 = scalar_select %p315, %s314, 31
        %s317 = smul.addr %s316, 4
        %s318 = scalar_lea.vmem %s1, %s317
        %p319 = pneg %p79
        %p320 = pneg %p76
        %p321 = pneg %p100
        %p322 = pneg %p97
        %p323 = pneg %p121
        %p324 = pneg %p118
        %p325 = pneg %p147
        %p326 = pneg %p144
        %s327 = sand.u32 %s134, 1
        %s328 = scalar_lea.sflag [#allocation5], %s327
        %s329 = sand.u32 %s134, 1
        %s330 = smul.addr %s329, 128
        %s331 = scalar_lea.vmem [#allocation4], %s330
        %s332 = smul.u32 16, %s22
        %s333 = smul.u32 16, %s23
        %p334 = scmp.lt.s32.totalorder %s333, 31
        %s335 = scalar_select %p334, %s333, 31
        %s336 = smul.addr %s335, 4
        %s337 = scalar_lea.vmem %s1, %s336
        %s338 = smul.u32 16, %s23
        %s339 = smul.u32 16, %s22
        %p341 = scmp.eq.s32.totalorder %s23, 0
        // Predicated region
        $region78: #{dfa_graph_encoder_forward.3} parent=72 // pred_check
          %p342 = pneg %p341
        $region79: #{dfa_graph_encoder_forward.3} parent=72 // pred_check_branch
          %344 = sbr.rel (%p342) target = $region81
        $region80: #{dfa_graph_encoder_forward.3} parent=72 // pred_region
          %345 = vst [vmem:[#allocation2] sm:$0xff] 0.0
          %346 = vst [vmem:[#allocation2 + $0x8] sm:$0xff] 0.0
          %347 = vst [vmem:[#allocation2 + $0x10] sm:$0xff] 0.0
          %348 = vst [vmem:[#allocation2 + $0x18] sm:$0xff] 0.0
          %349 = vst [vmem:[#allocation2 + $0x20] sm:$0xff] 0.0
          %350 = vst [vmem:[#allocation2 + $0x28] sm:$0xff] 0.0
          %351 = vst [vmem:[#allocation2 + $0x30] sm:$0xff] 0.0
          %352 = vst [vmem:[#allocation2 + $0x38] sm:$0xff] 0.0
          %353 = vst [vmem:[#allocation2 + $0x40] sm:$0xff] 0.0
          %354 = vst [vmem:[#allocation2 + $0x48] sm:$0xff] 0.0
          %355 = vst [vmem:[#allocation2 + $0x50] sm:$0xff] 0.0
          %356 = vst [vmem:[#allocation2 + $0x58] sm:$0xff] 0.0
          %357 = vst [vmem:[#allocation2 + $0x60] sm:$0xff] 0.0
          %358 = vst [vmem:[#allocation2 + $0x68] sm:$0xff] 0.0
          %359 = vst [vmem:[#allocation2 + $0x70] sm:$0xff] 0.0
          %360 = vst [vmem:[#allocation2 + $0x78] sm:$0xff] 0.0
        $region81: #{dfa_graph_encoder_forward.3} parent=72 // pred_fallthru
          _
        %v361 = vld [vmem:[#allocation2] sm:$0xff]
        %v362 = vld [vmem:[#allocation2 + $0x8] sm:$0xff]
        %v363 = vld [vmem:[#allocation2 + $0x10] sm:$0xff]
        %v364 = vld [vmem:[#allocation2 + $0x18] sm:$0xff]
        %v365 = vld [vmem:[#allocation2 + $0x20] sm:$0xff]
        %v366 = vld [vmem:[#allocation2 + $0x28] sm:$0xff]
        %v367 = vld [vmem:[#allocation2 + $0x30] sm:$0xff]
        %v368 = vld [vmem:[#allocation2 + $0x38] sm:$0xff]
        %v369 = vld [vmem:[#allocation2 + $0x40] sm:$0xff]
        %v370 = vld [vmem:[#allocation2 + $0x48] sm:$0xff]
        %v371 = vld [vmem:[#allocation2 + $0x50] sm:$0xff]
        %v372 = vld [vmem:[#allocation2 + $0x58] sm:$0xff]
        %v373 = vld [vmem:[#allocation2 + $0x60] sm:$0xff]
        %v374 = vld [vmem:[#allocation2 + $0x68] sm:$0xff]
        %v375 = vld [vmem:[#allocation2 + $0x70] sm:$0xff]
        %v376 = vld [vmem:[#allocation2 + $0x78] sm:$0xff]
        %v377 = vld [vmem:[%s304] sm:$0xf]
        %v378 = vld [vmem:[%s304 + $0x4] sm:$0xf]
        %v379 = vld [vmem:[%s304 + $0x8] sm:$0xf]
        %v380 = vld [vmem:[%s304 + $0xc] sm:$0xf]
        %v381 = vld [vmem:[%s304 + $0x10] sm:$0xf]
        %v382 = vld [vmem:[%s304 + $0x14] sm:$0xf]
        %v383 = vld [vmem:[%s304 + $0x18] sm:$0xf]
        %v384 = vld [vmem:[%s304 + $0x1c] sm:$0xf]
        %v385 = vld [vmem:[%s304 + $0x20] sm:$0xf]
        %v386 = vld [vmem:[%s304 + $0x24] sm:$0xf]
        %v387 = vld [vmem:[%s304 + $0x28] sm:$0xf]
        %v388 = vld [vmem:[%s304 + $0x2c] sm:$0xf]
        %v389 = vld [vmem:[%s304 + $0x30] sm:$0xf]
        %v390 = vld [vmem:[%s304 + $0x34] sm:$0xf]
        %v391 = vld [vmem:[%s304 + $0x38] sm:$0xf]
        %v392 = vld [vmem:[%s304 + $0x3c] sm:$0xf]
        %v393 = vld [vmem:[%s337] sm:$0xf]
        %v394 = vld [vmem:[%s337 + $0x4] sm:$0xf]
        %v395 = vld [vmem:[%s337 + $0x8] sm:$0xf]
        %v396 = vld [vmem:[%s337 + $0xc] sm:$0xf]
        %v397 = vld [vmem:[%s337 + $0x10] sm:$0xf]
        %v398 = vld [vmem:[%s337 + $0x14] sm:$0xf]
        %v399 = vld [vmem:[%s337 + $0x18] sm:$0xf]
        %v400 = vld [vmem:[%s337 + $0x1c] sm:$0xf]
        %v401 = vld [vmem:[%s337 + $0x20] sm:$0xf]
        %v402 = vld [vmem:[%s337 + $0x24] sm:$0xf]
        %v403 = vld [vmem:[%s337 + $0x28] sm:$0xf]
        %v404 = vld [vmem:[%s337 + $0x2c] sm:$0xf]
        %v405 = vld [vmem:[%s337 + $0x30] sm:$0xf]
        %v406 = vld [vmem:[%s337 + $0x34] sm:$0xf]
        %v407 = vld [vmem:[%s337 + $0x38] sm:$0xf]
        %v408 = vld [vmem:[%s337 + $0x3c] sm:$0xf]
        %v425 = vunpack.c.l.b16 %v377
        %v426 = vunpack.c.l.b16 %v378
        %v427 = vunpack.c.l.b16 %v379
        %v428 = vunpack.c.l.b16 %v380
        %v429 = vunpack.c.l.b16 %v381
        %v430 = vunpack.c.l.b16 %v382
        %v431 = vunpack.c.l.b16 %v383
        %v432 = vunpack.c.l.b16 %v384
        %v433 = vunpack.c.l.b16 %v385
        %v434 = vunpack.c.l.b16 %v386
        %v435 = vunpack.c.l.b16 %v387
        %v436 = vunpack.c.l.b16 %v388
        %v437 = vunpack.c.l.b16 %v389
        %v438 = vunpack.c.l.b16 %v390
        %v439 = vunpack.c.l.b16 %v391
        %v440 = vunpack.c.l.b16 %v392
        %v441 = vpack.c.b16 %v426, %v425
        %v442 = vpack.c.b16 %v428, %v427
        %v443 = vpack.c.b16 %v430, %v429
        %v444 = vpack.c.b16 %v432, %v431
        %v445 = vpack.c.b16 %v434, %v433
        %v446 = vpack.c.b16 %v436, %v435
        %v447 = vpack.c.b16 %v438, %v437
        %v448 = vpack.c.b16 %v440, %v439
        %v473 = vunpack.c.l.b16 %v393
        %v474 = vunpack.c.l.b16 %v394
        %v475 = vunpack.c.l.b16 %v395
        %v476 = vunpack.c.l.b16 %v396
        %v477 = vunpack.c.l.b16 %v397
        %v478 = vunpack.c.l.b16 %v398
        %v479 = vunpack.c.l.b16 %v399
        %v480 = vunpack.c.l.b16 %v400
        %v481 = vunpack.c.l.b16 %v401
        %v482 = vunpack.c.l.b16 %v402
        %v483 = vunpack.c.l.b16 %v403
        %v484 = vunpack.c.l.b16 %v404
        %v485 = vunpack.c.l.b16 %v405
        %v486 = vunpack.c.l.b16 %v406
        %v487 = vunpack.c.l.b16 %v407
        %v488 = vunpack.c.l.b16 %v408
        %v489 = vpack.c.b16 %v474, %v473
        %v490 = vpack.c.b16 %v476, %v475
        %v491 = vpack.c.b16 %v478, %v477
        %v492 = vpack.c.b16 %v480, %v479
        %v493 = vpack.c.b16 %v482, %v481
        %v494 = vpack.c.b16 %v484, %v483
        %v495 = vpack.c.b16 %v486, %v485
        %v496 = vpack.c.b16 %v488, %v487
        %505 = vmatprep.subr.bf16.mxu0 0
        %506 = vmatpush1.bf16.msra.mxu0 %v496
        %507 = vmatprep.subr.bf16.mxu0 0
        %508 = vmatpush1.bf16.msra.mxu0 %v495
        %509 = vmatprep.subr.bf16.mxu0 0
        %510 = vmatpush1.bf16.msra.mxu0 %v494
        %511 = vmatprep.subr.bf16.mxu0 0
        %512 = vmatpush1.bf16.msra.mxu0 %v493
        %513 = vmatprep.subr.bf16.mxu0 0
        %514 = vmatpush1.bf16.msra.mxu0 %v492
        %515 = vmatprep.subr.bf16.mxu0 0
        %516 = vmatpush1.bf16.msra.mxu0 %v491
        %517 = vmatprep.subr.bf16.mxu0 0
        %518 = vmatpush1.bf16.msra.mxu0 %v490
        %519 = vmatprep.subr.bf16.mxu0 0
        %520 = vmatpush1.bf16.msra.mxu0 %v489
        %521 = vmatprep.subr.bf16.mxu0 0
        %522 = vmatpush2.bf16.msra.mxu0 0
        %523 = vmatprep.subr.bf16.mxu0 0
        %524 = vmatpush2.bf16.msra.mxu0 0
        %525 = vmatprep.subr.bf16.mxu0 0
        %526 = vmatpush2.bf16.msra.mxu0 0
        %527 = vmatprep.subr.bf16.mxu0 0
        %528 = vmatpush2.bf16.msra.mxu0 0
        %529 = vmatprep.subr.bf16.mxu0 0
        %530 = vmatpush2.bf16.msra.mxu0 0
        %531 = vmatprep.subr.bf16.mxu0 0
        %532 = vmatpush2.bf16.msra.mxu0 0
        %533 = vmatprep.subr.bf16.mxu0 0
        %534 = vmatpush2.bf16.msra.mxu0 0
        %535 = vmatprep.subr.bf16.mxu0 0
        %536 = vmatpush2.bf16.msra.mxu0 0
        %537 = vmatprep.mubr.bf16.mxu0 0
        %538 = vmatmul.mubr.bf16.gmra.mxu0 %v441
        %v539 = vpop.f32.mrf.mxu0
        %v540 = vadd.f32 0.0, %v539
        %v541 = vpop.f32.mrf.mxu0
        %v542 = vpop.f32.mrf.mxu0
        %v543 = vadd.f32 0.0, %v542
        %v544 = vpop.f32.mrf.mxu0
        %545 = vmatprep.mubr.bf16.mxu0 0
        %546 = vmatmul.mubr.bf16.gmra.mxu0 %v442
        %v547 = vpop.f32.mrf.mxu0
        %v548 = vadd.f32 0.0, %v547
        %v549 = vpop.f32.mrf.mxu0
        %v550 = vpop.f32.mrf.mxu0
        %v551 = vadd.f32 0.0, %v550
        %v552 = vpop.f32.mrf.mxu0
        %553 = vmatprep.mubr.bf16.mxu0 0
        %554 = vmatmul.mubr.bf16.gmra.mxu0 %v443
        %v555 = vpop.f32.mrf.mxu0
        %v556 = vadd.f32 0.0, %v555
        %v557 = vpop.f32.mrf.mxu0
        %v558 = vpop.f32.mrf.mxu0
        %v559 = vadd.f32 0.0, %v558
        %v560 = vpop.f32.mrf.mxu0
        %561 = vmatprep.mubr.bf16.mxu0 0
        %562 = vmatmul.mubr.bf16.gmra.mxu0 %v444
        %v563 = vpop.f32.mrf.mxu0
        %v564 = vadd.f32 0.0, %v563
        %v565 = vpop.f32.mrf.mxu0
        %v566 = vpop.f32.mrf.mxu0
        %v567 = vadd.f32 0.0, %v566
        %v568 = vpop.f32.mrf.mxu0
        %569 = vmatprep.mubr.bf16.mxu0 0
        %570 = vmatmul.mubr.bf16.gmra.mxu0 %v445
        %v571 = vpop.f32.mrf.mxu0
        %v572 = vadd.f32 0.0, %v571
        %v573 = vpop.f32.mrf.mxu0
        %v574 = vpop.f32.mrf.mxu0
        %v575 = vadd.f32 0.0, %v574
        %v576 = vpop.f32.mrf.mxu0
        %577 = vmatprep.mubr.bf16.mxu0 0
        %578 = vmatmul.mubr.bf16.gmra.mxu0 %v446
        %v579 = vpop.f32.mrf.mxu0
        %v580 = vadd.f32 0.0, %v579
        %v581 = vpop.f32.mrf.mxu0
        %v582 = vpop.f32.mrf.mxu0
        %v583 = vadd.f32 0.0, %v582
        %v584 = vpop.f32.mrf.mxu0
        %585 = vmatprep.mubr.bf16.mxu0 0
        %586 = vmatmul.mubr.bf16.gmra.mxu0 %v447
        %v587 = vpop.f32.mrf.mxu0
        %v588 = vadd.f32 0.0, %v587
        %v589 = vpop.f32.mrf.mxu0
        %v590 = vpop.f32.mrf.mxu0
        %v591 = vadd.f32 0.0, %v590
        %v592 = vpop.f32.mrf.mxu0
        %593 = vmatprep.mubr.bf16.mxu0 0
        %594 = vmatmul.mubr.bf16.gmra.mxu0 %v448
        %v595 = vpop.f32.mrf.mxu0
        %v596 = vadd.f32 0.0, %v595
        %v597 = vpop.f32.mrf.mxu0
        %v598 = vpop.f32.mrf.mxu0
        %v599 = vadd.f32 0.0, %v598
        %v600 = vpop.f32.mrf.mxu0
        %601 = vdwg.mxu0
        %v602 = vadd.f32 %v361, %v540
        %v603 = vadd.f32 %v362, %v543
        %v604 = vadd.f32 %v363, %v548
        %v605 = vadd.f32 %v364, %v551
        %v606 = vadd.f32 %v365, %v556
        %v607 = vadd.f32 %v366, %v559
        %v608 = vadd.f32 %v367, %v564
        %v609 = vadd.f32 %v368, %v567
        %v610 = vadd.f32 %v369, %v572
        %v611 = vadd.f32 %v370, %v575
        %v612 = vadd.f32 %v371, %v580
        %v613 = vadd.f32 %v372, %v583
        %v614 = vadd.f32 %v373, %v588
        %v615 = vadd.f32 %v374, %v591
        %v616 = vadd.f32 %v375, %v596
        %v617 = vadd.f32 %v376, %v599
        %618 = vst [vmem:[#allocation2] sm:$0xff] %v602
        %619 = vst [vmem:[#allocation2 + $0x8] sm:$0xff] %v603
        %620 = vst [vmem:[#allocation2 + $0x10] sm:$0xff] %v604
        %621 = vst [vmem:[#allocation2 + $0x18] sm:$0xff] %v605
        %622 = vst [vmem:[#allocation2 + $0x20] sm:$0xff] %v606
        %623 = vst [vmem:[#allocation2 + $0x28] sm:$0xff] %v607
        %624 = vst [vmem:[#allocation2 + $0x30] sm:$0xff] %v608
        %625 = vst [vmem:[#allocation2 + $0x38] sm:$0xff] %v609
        %626 = vst [vmem:[#allocation2 + $0x40] sm:$0xff] %v610
        %627 = vst [vmem:[#allocation2 + $0x48] sm:$0xff] %v611
        %628 = vst [vmem:[#allocation2 + $0x50] sm:$0xff] %v612
        %629 = vst [vmem:[#allocation2 + $0x58] sm:$0xff] %v613
        %630 = vst [vmem:[#allocation2 + $0x60] sm:$0xff] %v614
        %631 = vst [vmem:[#allocation2 + $0x68] sm:$0xff] %v615
        %632 = vst [vmem:[#allocation2 + $0x70] sm:$0xff] %v616
        %633 = vst [vmem:[#allocation2 + $0x78] sm:$0xff] %v617
        %p634 = scmp.eq.s32.totalorder %s23, 1
        // Predicated region
        $region82: #{dfa_graph_encoder_forward.3} parent=72 // pred_check
          %p635 = pneg %p634
        $region83: #{dfa_graph_encoder_forward.3} parent=72 // pred_check_branch
          %637 = sbr.rel (%p635) target = $region85
        $region84: #{dfa_graph_encoder_forward.3} parent=72 // pred_region
          %v638 = vld [vmem:[#allocation2] sm:$0xff]
          %v639 = vld [vmem:[#allocation2 + $0x8] sm:$0xff]
          %v640 = vld [vmem:[#allocation2 + $0x10] sm:$0xff]
          %v641 = vld [vmem:[#allocation2 + $0x18] sm:$0xff]
          %v642 = vld [vmem:[#allocation2 + $0x20] sm:$0xff]
          %v643 = vld [vmem:[#allocation2 + $0x28] sm:$0xff]
          %v644 = vld [vmem:[#allocation2 + $0x30] sm:$0xff]
          %v645 = vld [vmem:[#allocation2 + $0x38] sm:$0xff]
          %v646 = vld [vmem:[#allocation2 + $0x40] sm:$0xff]
          %v647 = vld [vmem:[#allocation2 + $0x48] sm:$0xff]
          %v648 = vld [vmem:[#allocation2 + $0x50] sm:$0xff]
          %v649 = vld [vmem:[#allocation2 + $0x58] sm:$0xff]
          %v650 = vld [vmem:[#allocation2 + $0x60] sm:$0xff]
          %v651 = vld [vmem:[#allocation2 + $0x68] sm:$0xff]
          %v652 = vld [vmem:[#allocation2 + $0x70] sm:$0xff]
          %v653 = vld [vmem:[#allocation2 + $0x78] sm:$0xff]
          %v654 = vld [vmem:[%s2] sm:$0xf]
          %v655 = vld [vmem:[%s2 + $0x4] sm:$0xf]
          %v656 = vld [vmem:[%s2 + $0x8] sm:$0xf]
          %v657 = vld [vmem:[%s2 + $0xc] sm:$0xf]
          %v658 = vld [vmem:[%s2 + $0x10] sm:$0xf]
          %v659 = vld [vmem:[%s2 + $0x14] sm:$0xf]
          %v660 = vld [vmem:[%s2 + $0x18] sm:$0xf]
          %v661 = vld [vmem:[%s2 + $0x1c] sm:$0xf]
          %v662 = vld [vmem:[%s2 + $0x20] sm:$0xf]
          %v663 = vld [vmem:[%s2 + $0x24] sm:$0xf]
          %v664 = vld [vmem:[%s2 + $0x28] sm:$0xf]
          %v665 = vld [vmem:[%s2 + $0x2c] sm:$0xf]
          %v666 = vld [vmem:[%s2 + $0x30] sm:$0xf]
          %v667 = vld [vmem:[%s2 + $0x34] sm:$0xf]
          %v668 = vld [vmem:[%s2 + $0x38] sm:$0xf]
          %v669 = vld [vmem:[%s2 + $0x3c] sm:$0xf]
          %v670 = vunpack.c.l.bf16 %v654
          %v671 = vunpack.c.l.bf16 %v655
          %v672 = vunpack.c.l.bf16 %v656
          %v673 = vunpack.c.l.bf16 %v657
          %v674 = vunpack.c.l.bf16 %v658
          %v675 = vunpack.c.l.bf16 %v659
          %v676 = vunpack.c.l.bf16 %v660
          %v677 = vunpack.c.l.bf16 %v661
          %v678 = vunpack.c.l.bf16 %v662
          %v679 = vunpack.c.l.bf16 %v663
          %v680 = vunpack.c.l.bf16 %v664
          %v681 = vunpack.c.l.bf16 %v665
          %v682 = vunpack.c.l.bf16 %v666
          %v683 = vunpack.c.l.bf16 %v667
          %v684 = vunpack.c.l.bf16 %v668
          %v685 = vunpack.c.l.bf16 %v669
          %v686 = vld [vmem:[%s3] sm:$0x1]
          %v688 = vlaneseq
          %v689 = vshrl.u32 %v688, 7
          %v690 = vsub.s32 0, %v689
          %v691 = vrot.slane %v686, %v690
          %693 = vmatprep.subr.mxu0 0.0
          %694 = vmatpush1.msra.mxu0 %v685
          %695 = vmatprep.subr.mxu0 0.0
          %696 = vmatpush1.msra.mxu0 %v684
          %697 = vmatprep.subr.mxu0 0.0
          %698 = vmatpush1.msra.mxu0 %v683
          %699 = vmatprep.subr.mxu0 0.0
          %700 = vmatpush1.msra.mxu0 %v682
          %701 = vmatprep.subr.mxu0 0.0
          %702 = vmatpush1.msra.mxu0 %v681
          %703 = vmatprep.subr.mxu0 0.0
          %704 = vmatpush1.msra.mxu0 %v680
          %705 = vmatprep.subr.mxu0 0.0
          %706 = vmatpush1.msra.mxu0 %v679
          %707 = vmatprep.subr.mxu0 0.0
          %708 = vmatpush1.msra.mxu0 %v678
          %709 = vmatprep.subr.mxu0 0.0
          %710 = vmatpush1.msra.mxu0 %v677
          %711 = vmatprep.subr.mxu0 0.0
          %712 = vmatpush1.msra.mxu0 %v676
          %713 = vmatprep.subr.mxu0 0.0
          %714 = vmatpush1.msra.mxu0 %v675
          %715 = vmatprep.subr.mxu0 0.0
          %716 = vmatpush1.msra.mxu0 %v674
          %717 = vmatprep.subr.mxu0 0.0
          %718 = vmatpush1.msra.mxu0 %v673
          %719 = vmatprep.subr.mxu0 0.0
          %720 = vmatpush1.msra.mxu0 %v672
          %721 = vmatprep.subr.mxu0 0.0
          %722 = vmatpush1.msra.mxu0 %v671
          %723 = vmatprep.subr.mxu0 0.0
          %724 = vmatpush1.msra.mxu0 %v670
          %725 = vmatprep.subr.mxu0 0.0
          %726 = vmatpush2.msra.mxu0 0.0
          %727 = vmatprep.subr.mxu0 0.0
          %728 = vmatpush2.msra.mxu0 0.0
          %729 = vmatprep.subr.mxu0 0.0
          %730 = vmatpush2.msra.mxu0 0.0
          %731 = vmatprep.subr.mxu0 0.0
          %732 = vmatpush2.msra.mxu0 0.0
          %733 = vmatprep.subr.mxu0 0.0
          %734 = vmatpush2.msra.mxu0 0.0
          %735 = vmatprep.subr.mxu0 0.0
          %736 = vmatpush2.msra.mxu0 0.0
          %737 = vmatprep.subr.mxu0 0.0
          %738 = vmatpush2.msra.mxu0 0.0
          %739 = vmatprep.subr.mxu0 0.0
          %740 = vmatpush2.msra.mxu0 0.0
          %741 = vmatprep.subr.mxu0 0.0
          %742 = vmatpush2.msra.mxu0 0.0
          %743 = vmatprep.subr.mxu0 0.0
          %744 = vmatpush2.msra.mxu0 0.0
          %745 = vmatprep.subr.mxu0 0.0
          %746 = vmatpush2.msra.mxu0 0.0
          %747 = vmatprep.subr.mxu0 0.0
          %748 = vmatpush2.msra.mxu0 0.0
          %749 = vmatprep.subr.mxu0 0.0
          %750 = vmatpush2.msra.mxu0 0.0
          %751 = vmatprep.subr.mxu0 0.0
          %752 = vmatpush2.msra.mxu0 0.0
          %753 = vmatprep.subr.mxu0 0.0
          %754 = vmatpush2.msra.mxu0 0.0
          %755 = vmatprep.subr.mxu0 0.0
          %756 = vmatpush2.msra.mxu0 0.0
          %757 = vmatprep.mubr.f32.mxu0 0.0
          %758 = vmatmul.mubr.f32.gmra.mxu0 %v638
          %v759 = vpop.f32.mrf.mxu0
          %v760 = vadd.f32 %v691, %v759
          %v761 = vpop.f32.mrf.mxu0
          %762 = vmatprep.mubr.f32.mxu0 0.0
          %763 = vmatmul.mubr.f32.gmra.mxu0 %v639
          %v764 = vpop.f32.mrf.mxu0
          %v765 = vadd.f32 %v691, %v764
          %v766 = vpop.f32.mrf.mxu0
          %767 = vmatprep.mubr.f32.mxu0 0.0
          %768 = vmatmul.mubr.f32.gmra.mxu0 %v640
          %v769 = vpop.f32.mrf.mxu0
          %v770 = vadd.f32 %v691, %v769
          %v771 = vpop.f32.mrf.mxu0
          %772 = vmatprep.mubr.f32.mxu0 0.0
          %773 = vmatmul.mubr.f32.gmra.mxu0 %v641
          %v774 = vpop.f32.mrf.mxu0
          %v775 = vadd.f32 %v691, %v774
          %v776 = vpop.f32.mrf.mxu0
          %777 = vmatprep.mubr.f32.mxu0 0.0
          %778 = vmatmul.mubr.f32.gmra.mxu0 %v642
          %v779 = vpop.f32.mrf.mxu0
          %v780 = vadd.f32 %v691, %v779
          %v781 = vpop.f32.mrf.mxu0
          %782 = vmatprep.mubr.f32.mxu0 0.0
          %783 = vmatmul.mubr.f32.gmra.mxu0 %v643
          %v784 = vpop.f32.mrf.mxu0
          %v785 = vadd.f32 %v691, %v784
          %v786 = vpop.f32.mrf.mxu0
          %787 = vmatprep.mubr.f32.mxu0 0.0
          %788 = vmatmul.mubr.f32.gmra.mxu0 %v644
          %v789 = vpop.f32.mrf.mxu0
          %v790 = vadd.f32 %v691, %v789
          %v791 = vpop.f32.mrf.mxu0
          %792 = vmatprep.mubr.f32.mxu0 0.0
          %793 = vmatmul.mubr.f32.gmra.mxu0 %v645
          %v794 = vpop.f32.mrf.mxu0
          %v795 = vadd.f32 %v691, %v794
          %v796 = vpop.f32.mrf.mxu0
          %797 = vmatprep.mubr.f32.mxu0 0.0
          %798 = vmatmul.mubr.f32.gmra.mxu0 %v646
          %v799 = vpop.f32.mrf.mxu0
          %v800 = vadd.f32 %v691, %v799
          %v801 = vpop.f32.mrf.mxu0
          %802 = vmatprep.mubr.f32.mxu0 0.0
          %803 = vmatmul.mubr.f32.gmra.mxu0 %v647
          %v804 = vpop.f32.mrf.mxu0
          %v805 = vadd.f32 %v691, %v804
          %v806 = vpop.f32.mrf.mxu0
          %807 = vmatprep.mubr.f32.mxu0 0.0
          %808 = vmatmul.mubr.f32.gmra.mxu0 %v648
          %v809 = vpop.f32.mrf.mxu0
          %v810 = vadd.f32 %v691, %v809
          %v811 = vpop.f32.mrf.mxu0
          %812 = vmatprep.mubr.f32.mxu0 0.0
          %813 = vmatmul.mubr.f32.gmra.mxu0 %v649
          %v814 = vpop.f32.mrf.mxu0
          %v815 = vadd.f32 %v691, %v814
          %v816 = vpop.f32.mrf.mxu0
          %817 = vmatprep.mubr.f32.mxu0 0.0
          %818 = vmatmul.mubr.f32.gmra.mxu0 %v650
          %v819 = vpop.f32.mrf.mxu0
          %v820 = vadd.f32 %v691, %v819
          %v821 = vpop.f32.mrf.mxu0
          %822 = vmatprep.mubr.f32.mxu0 0.0
          %823 = vmatmul.mubr.f32.gmra.mxu0 %v651
          %v824 = vpop.f32.mrf.mxu0
          %v825 = vadd.f32 %v691, %v824
          %v826 = vpop.f32.mrf.mxu0
          %827 = vmatprep.mubr.f32.mxu0 0.0
          %828 = vmatmul.mubr.f32.gmra.mxu0 %v652
          %v829 = vpop.f32.mrf.mxu0
          %v830 = vadd.f32 %v691, %v829
          %v831 = vpop.f32.mrf.mxu0
          %832 = vmatprep.mubr.f32.mxu0 0.0
          %833 = vmatmul.mubr.f32.gmra.mxu0 %v653
          %v834 = vpop.f32.mrf.mxu0
          %v835 = vadd.f32 %v691, %v834
          %v836 = vpop.f32.mrf.mxu0
          %837 = vdwg.mxu0
          %838 = vst [vmem:[%s331] sm:$0xff] %v760
          %839 = vst [vmem:[%s331 + $0x8] sm:$0xff] %v765
          %840 = vst [vmem:[%s331 + $0x10] sm:$0xff] %v770
          %841 = vst [vmem:[%s331 + $0x18] sm:$0xff] %v775
          %842 = vst [vmem:[%s331 + $0x20] sm:$0xff] %v780
          %843 = vst [vmem:[%s331 + $0x28] sm:$0xff] %v785
          %844 = vst [vmem:[%s331 + $0x30] sm:$0xff] %v790
          %845 = vst [vmem:[%s331 + $0x38] sm:$0xff] %v795
          %846 = vst [vmem:[%s331 + $0x40] sm:$0xff] %v800
          %847 = vst [vmem:[%s331 + $0x48] sm:$0xff] %v805
          %848 = vst [vmem:[%s331 + $0x50] sm:$0xff] %v810
          %849 = vst [vmem:[%s331 + $0x58] sm:$0xff] %v815
          %850 = vst [vmem:[%s331 + $0x60] sm:$0xff] %v820
          %851 = vst [vmem:[%s331 + $0x68] sm:$0xff] %v825
          %852 = vst [vmem:[%s331 + $0x70] sm:$0xff] %v830
          %853 = vst [vmem:[%s331 + $0x78] sm:$0xff] %v835
        $region85: #{dfa_graph_encoder_forward.3} parent=72 // pred_fallthru
          _
        %s854 = sand.u32 %s134, 1
        %s855 = scalar_lea.sflag [#allocation5], %s854
        %s856 = sand.u32 %s134, 1
        %s857 = smul.addr %s856, 128
        %s858 = scalar_lea.vmem [#allocation4], %s857
        // Predicated region
        $region86: #{dfa_graph_encoder_forward.3} parent=72 // pred_check
          %p859 = pneg %p144
        $region87: #{dfa_graph_encoder_forward.3} parent=72 // pred_check_branch
          %861 = sbr.rel (%p859) target = $region89
        $region88: #{dfa_graph_encoder_forward.3} parent=72 // pred_region
          %s862 = smul.u32 16, %s22
          %s864 = ssub.s32 2048, 2048
          %865 = vsyncadd %s855, %s864
          %s866 = smul.addr %s862, 128
          %s867 = scalar_lea.hbm %s4, %s866
          %s868 = sshll.u32 %s858, 4
          %s869 = int_to_ptr.vmem [resolvable:$true] %s868
          %874 = dma.vmem_to_hbm [thread:$0]  %s869, 2048, %s867, %s855, 128, 128, 8
        $region89: #{dfa_graph_encoder_forward.3} parent=72 // pred_fallthru
          _
      $region73: #{dfa_graph_encoder_forward.3} parent=5 // pred_fallthru
        _
      %p875 = scmp.le.s32.totalorder 2, %s13
      // Predicated region
      $region90: #{dfa_graph_encoder_forward.3} parent=5 // pred_check
        %p876 = pneg %p875
      $region91: #{dfa_graph_encoder_forward.3} parent=5 // pred_check_branch
        %878 = sbr.rel (%p876) target = $region93
      $region92: #{dfa_graph_encoder_forward.3} parent=5 // pred_region
        %s879 = ssub.s32 %s13, 2
        // Predicated region
        $region94: #{dfa_graph_encoder_forward.3} parent=92 // pred_check
          %p880 = pneg %p150
        $region95: #{dfa_graph_encoder_forward.3} parent=92 // pred_check_branch
          %882 = sbr.rel (%p880) target = $region97
        $region96: #{dfa_graph_encoder_forward.3} parent=92 // pred_region
          %s883 = sand.u32 %s135, 1
          %s884 = scalar_lea.sflag [#allocation5], %s883
          %s885 = sand.u32 %s135, 1
          %s886 = smul.addr %s885, 128
          %s887 = scalar_lea.vmem [#allocation4], %s886
          %888 = dma.done %s884, 2048
        $region97: #{dfa_graph_encoder_forward.3} parent=92 // pred_fallthru
          _
      $region93: #{dfa_graph_encoder_forward.3} parent=5 // pred_fallthru
        _
    $region6: #{dfa_graph_encoder_forward.3} parent=1 // loop_footer
      %s17 = sadd.s32 1, %s13
    $region7: #{dfa_graph_encoder_forward.3} parent=1 // loop_footer_branch
      %12 = sbr.rel target = $region3
    $region8: #{dfa_graph_encoder_forward.3} parent=1 // loop_exit
      _
    %889 = vsyncpa [#allocation5], 1
    %s890 = scalar_lea.sflag [#allocation5], 1
    %891 = vsyncpa %s890, 1

// kernel: dfa_graph_encoder_forward.2
$region0: #{dfa_graph_encoder_forward.2}
  #allocation0 [shape = 'u32[]', space=smem, size = 0x4, offset = 0x4, fixed_abs, tag = 'smem constant byte address 0x4 - core index']
  #allocation1 [shape = 'u32[144,128]{1,0:T(1,128)}', space=vmem, size = 0x12000, scoped, tag = 'internal scratch']
  #allocation2 [shape = 'f32[128,128]{1,0:T(8,128)}', space=vmem, size = 0x10000, scoped, tag = 'scratch operand']
  %s0 = inlined_call_operand.hbm [shape: bf16[256,256], index: 0, kind: input, shape index: {}]
  %s1 = inlined_call_operand.hbm [shape: bf16[256,128], index: 1, kind: input, shape index: {}]
  %s2 = inlined_call_operand.hbm [shape: bf16[128,128], index: 2, kind: input, shape index: {}]
  %s3 = inlined_call_operand.vmem [shape: f32[1,128], index: 3, kind: input, shape index: {}]
  %s4 = inlined_call_operand.vmem [shape: bf16[256,128], index: 4, kind: output, shape index: {}]
  %s5 = sld [smem:[#allocation0]]
  $region69: #{dfa_graph_encoder_forward.2} parent=0
    _
  %s7 = ssub.s32 1, %s5
  %s8 = scalar_select 0, %s7, %s5
  $region1: #{dfa_graph_encoder_forward.2} parent=0
    #allocation3 [shape = 'u8[65536]{0}', space=vmem, size = 0x10000, scoped, tag = 'input window, operand 0']
    #allocation4 [shape = 's32[2]{0}', space=sflag, size = 0x8, scoped, tag = 'scoped memory for dfa_graph_encoder_forward.2']
    #allocation5 [shape = 'u8[65536]{0}', space=vmem, size = 0x10000, scoped, tag = 'input window, operand 1']
    #allocation6 [shape = 's32[2]{0}', space=sflag, size = 0x8, scoped, tag = 'scoped memory for dfa_graph_encoder_forward.2']
    #allocation7 [shape = 'u8[32768]{0}', space=vmem, size = 0x8000, scoped, tag = 'input window, operand 2, single buffered']
    %9 = vsyncpa [#allocation4], 0
    %s10 = scalar_lea.sflag [#allocation4], 1
    %11 = vsyncpa %s10, 0
    %12 = vsyncpa [#allocation6], 0
    %s13 = scalar_lea.sflag [#allocation6], 1
    %14 = vsyncpa %s13, 0
    loop: start=0, step=1, limit=6
    $region2: #{dfa_graph_encoder_forward.2} parent=1 // loop_pre_header
      _
    $region3: #{dfa_graph_encoder_forward.2} parent=1 // loop_header
      %s16 = sphi 0, %s20
      %p17 = scmp.ge.s32.totalorder %s16, 6
      %s23 = sphi 0, %s35
      %s24 = sphi 0, %s31
      %s25 = sphi 0, %s23
      %s26 = sphi 0, %s24
      %s27 = sphi 0, %s25
      %s28 = sphi 0, %s26
      %s40 = sphi 0, %s42
      %s43 = sphi 0, %s40
      %s44 = sphi 0, %s43
      %s60 = sphi 0, %s44
      %s66 = sphi 0, %s68
      %s69 = sphi 0, %s66
      %s70 = sphi 0, %s69
      %s86 = sphi 0, %s70
      %s90 = sphi 0, %s90
      %s92 = sphi 0, %s90
      %s93 = sphi 0, %s92
      %s107 = sphi 0, %s93
      %s111 = sphi 0, %s111
      %s113 = sphi 0, %s111
      %s114 = sphi 0, %s113
      %s128 = sphi 0, %s114
      %s134 = sphi 0, %s136
      %s137 = sphi 0, %s134
      %s138 = sphi 0, %s137
      %s154 = sphi 0, %s138
    $region4: #{dfa_graph_encoder_forward.2} parent=1 // loop_header_branch
      %19 = sbr.rel (%p17) target = $region8
    $region5: #{dfa_graph_encoder_forward.2} parent=1 // loop_body
      %s21 = ssub.s32 %s16, 1
      %s22 = ssub.s32 %s16, 2
      %s29 = sadd.s32 1, %s24
      %p30 = scmp.ge.s32.totalorder %s29, 2
      %s31 = scalar_select %p30, 0, %s29
      %s32 = sadd.s32 1, %s23
      %s33 = scalar_select %p30, %s32, %s23
      %p34 = scmp.ge.s32.totalorder %s33, 2
      %s35 = scalar_select %p34, 0, %s33
      %s36 = ssub.s32 %s23, %s35
      %s37 = ssub.s32 %s24, %s31
      %s38 = sor.u32 %s36, %s37
      %p39 = scmp.eq.s32.totalorder %s38, 0
      %s41 = sadd.s32 %s40, 1
      %s42 = scalar_select %p39, %s40, %s41
      %p45 = pneg %p39
      %p46 = scmp.eq.s32.totalorder %s16, 3
      %p47 = por %p45, %p46
      %p48 = scmp.ne.s32.totalorder %s40, %s43
      %p49 = scmp.eq.s32.totalorder %s16, 0
      %p50 = por %p48, %p49
      %p51 = scmp.ne.s32.totalorder %s40, %s43
      %p52 = scmp.eq.s32.totalorder %s21, 3
      %p53 = por %p51, %p52
      %p54 = scmp.ne.s32.totalorder %s43, %s44
      %p55 = scmp.eq.s32.totalorder %s21, 0
      %p56 = por %p54, %p55
      %p57 = scmp.ne.s32.totalorder %s43, %s44
      %p58 = scmp.eq.s32.totalorder %s22, 3
      %p59 = por %p57, %p58
      %p61 = scmp.ne.s32.totalorder %s44, %s60
      %p62 = scmp.eq.s32.totalorder %s22, 0
      %p63 = por %p61, %p62
      %s64 = ssub.s32 %s24, %s31
      %p65 = scmp.eq.s32.totalorder %s64, 0
      %s67 = sadd.s32 %s66, 1
      %s68 = scalar_select %p65, %s66, %s67
      %p71 = pneg %p65
      %p72 = scmp.eq.s32.totalorder %s16, 3
      %p73 = por %p71, %p72
      %p74 = scmp.ne.s32.totalorder %s66, %s69
      %p75 = scmp.eq.s32.totalorder %s16, 0
      %p76 = por %p74, %p75
      %p77 = scmp.ne.s32.totalorder %s66, %s69
      %p78 = scmp.eq.s32.totalorder %s21, 3
      %p79 = por %p77, %p78
      %p80 = scmp.ne.s32.totalorder %s69, %s70
      %p81 = scmp.eq.s32.totalorder %s21, 0
      %p82 = por %p80, %p81
      %p83 = scmp.ne.s32.totalorder %s69, %s70
      %p84 = scmp.eq.s32.totalorder %s22, 3
      %p85 = por %p83, %p84
      %p87 = scmp.ne.s32.totalorder %s70, %s86
      %p88 = scmp.eq.s32.totalorder %s22, 0
      %p89 = por %p87, %p88
      %s91 = sadd.s32 %s90, 1
      %p94 = scmp.eq.s32.totalorder %s16, 3
      %p95 = scmp.ne.s32.totalorder %s90, %s92
      %p96 = scmp.eq.s32.totalorder %s16, 0
      %p97 = por %p95, %p96
      %p98 = scmp.ne.s32.totalorder %s90, %s92
      %p99 = scmp.eq.s32.totalorder %s21, 3
      %p100 = por %p98, %p99
      %p101 = scmp.ne.s32.totalorder %s92, %s93
      %p102 = scmp.eq.s32.totalorder %s21, 0
      %p103 = por %p101, %p102
      %p104 = scmp.ne.s32.totalorder %s92, %s93
      %p105 = scmp.eq.s32.totalorder %s22, 3
      %p106 = por %p104, %p105
      %p108 = scmp.ne.s32.totalorder %s93, %s107
      %p109 = scmp.eq.s32.totalorder %s22, 0
      %p110 = por %p108, %p109
      %s112 = sadd.s32 %s111, 1
      %p115 = scmp.eq.s32.totalorder %s16, 3
      %p116 = scmp.ne.s32.totalorder %s111, %s113
      %p117 = scmp.eq.s32.totalorder %s16, 0
      %p118 = por %p116, %p117
      %p119 = scmp.ne.s32.totalorder %s111, %s113
      %p120 = scmp.eq.s32.totalorder %s21, 3
      %p121 = por %p119, %p120
      %p122 = scmp.ne.s32.totalorder %s113, %s114
      %p123 = scmp.eq.s32.totalorder %s21, 0
      %p124 = por %p122, %p123
      %p125 = scmp.ne.s32.totalorder %s113, %s114
      %p126 = scmp.eq.s32.totalorder %s22, 3
      %p127 = por %p125, %p126
      %p129 = scmp.ne.s32.totalorder %s114, %s128
      %p130 = scmp.eq.s32.totalorder %s22, 0
      %p131 = por %p129, %p130
      %s132 = ssub.s32 %s23, %s35
      %p133 = scmp.eq.s32.totalorder %s132, 0
      %s135 = sadd.s32 %s134, 1
      %s136 = scalar_select %p133, %s134, %s135
      %p139 = pneg %p133
      %p140 = scmp.eq.s32.totalorder %s16, 3
      %p141 = por %p139, %p140
      %p142 = scmp.ne.s32.totalorder %s134, %s137
      %p143 = scmp.eq.s32.totalorder %s16, 0
      %p144 = por %p142, %p143
      %p145 = scmp.ne.s32.totalorder %s134, %s137
      %p146 = scmp.eq.s32.totalorder %s21, 3
      %p147 = por %p145, %p146
      %p148 = scmp.ne.s32.totalorder %s137, %s138
      %p149 = scmp.eq.s32.totalorder %s21, 0
      %p150 = por %p148, %p149
      %p151 = scmp.ne.s32.totalorder %s137, %s138
      %p152 = scmp.eq.s32.totalorder %s22, 3
      %p153 = por %p151, %p152
      %p155 = scmp.ne.s32.totalorder %s138, %s154
      %p156 = scmp.eq.s32.totalorder %s22, 0
      %p157 = por %p155, %p156
      %p158 = scmp.le.s32.totalorder 1, %s16
      %p159 = scmp.lt.s32.totalorder %s16, 5
      %p160 = pnand %p158, %p159
      %p161 = pneg %p160
      // Predicated region
      $region9: #{dfa_graph_encoder_forward.2} parent=5 // pred_check
        _
      $region10: #{dfa_graph_encoder_forward.2} parent=5 // pred_check_branch
        %163 = sbr.rel (%p160) target = $region12
      $region11: #{dfa_graph_encoder_forward.2} parent=5 // pred_region
        %s164 = ssub.s32 %s16, 1
        // Predicated region
        $region13: #{dfa_graph_encoder_forward.2} parent=11 // pred_check
          %p165 = pneg %p103
        $region14: #{dfa_graph_encoder_forward.2} parent=11 // pred_check_branch
          %167 = sbr.rel (%p165) target = $region16
        $region15: #{dfa_graph_encoder_forward.2} parent=11 // pred_region
          %s169 = ssub.s32 1024, 1024
          %170 = vsyncadd [#allocation6], %s169
          %s171 = sshll.u32 [#allocation7], 4
          %s172 = int_to_ptr.vmem [resolvable:$true] %s171
          %177 = dma.hbm_to_vmem [thread:$0]  %s2, 1024, %s172, [#allocation6], 64, 64, 4
        $region16: #{dfa_graph_encoder_forward.2} parent=11 // pred_fallthru
          _
        // Predicated region
        $region17: #{dfa_graph_encoder_forward.2} parent=11 // pred_check
          %p178 = pneg %p124
        $region18: #{dfa_graph_encoder_forward.2} parent=11 // pred_check_branch
          %180 = sbr.rel (%p178) target = $region20
        $region19: #{dfa_graph_encoder_forward.2} parent=11 // pred_region
          _
        $region20: #{dfa_graph_encoder_forward.2} parent=11 // pred_fallthru
          _
      $region12: #{dfa_graph_encoder_forward.2} parent=5 // pred_fallthru
        _
      %p181 = scmp.lt.s32.totalorder %s16, 4
      // Predicated region
      $region21: #{dfa_graph_encoder_forward.2} parent=5 // pred_check
        %p182 = pneg %p181
      $region22: #{dfa_graph_encoder_forward.2} parent=5 // pred_check_branch
        %184 = sbr.rel (%p182) target = $region24
      $region23: #{dfa_graph_encoder_forward.2} parent=5 // pred_region
        // Predicated region
        $region25: #{dfa_graph_encoder_forward.2} parent=23 // pred_check
          %p185 = pneg %p50
        $region26: #{dfa_graph_encoder_forward.2} parent=23 // pred_check_branch
          %187 = sbr.rel (%p185) target = $region28
        $region27: #{dfa_graph_encoder_forward.2} parent=23 // pred_region
          %s188 = sand.u32 %s40, 1
          %s189 = scalar_lea.sflag [#allocation4], %s188
          %s190 = sand.u32 %s40, 1
          %s191 = smul.addr %s190, 64
          %s192 = scalar_lea.vmem [#allocation3], %s191
          %s193 = smul.u32 16, %s23
          %s195 = ssub.s32 1024, 1024
          %196 = vsyncadd %s189, %s195
          %s197 = smul.addr %s193, 2
          %s198 = sadd.s32 %s24, %s197
          %s199 = smul.addr %s198, 64
          %s200 = scalar_lea.hbm %s0, %s199
          %s201 = sshll.u32 %s192, 4
          %s202 = int_to_ptr.vmem [resolvable:$true] %s201
          %207 = dma.hbm_to_vmem [thread:$0]  %s200, 1024, %s202, %s189, 128, 64, 4
        $region28: #{dfa_graph_encoder_forward.2} parent=23 // pred_fallthru
          _
        // Predicated region
        $region29: #{dfa_graph_encoder_forward.2} parent=23 // pred_check
          %p208 = pneg %p76
        $region30: #{dfa_graph_encoder_forward.2} parent=23 // pred_check_branch
          %210 = sbr.rel (%p208) target = $region32
        $region31: #{dfa_graph_encoder_forward.2} parent=23 // pred_region
          %s211 = sand.u32 %s16, 1
          %s212 = scalar_lea.sflag [#allocation6], %s211
          %s213 = sand.u32 %s66, 1
          %s214 = smul.addr %s213, 64
          %s215 = scalar_lea.vmem [#allocation5], %s214
          %s216 = smul.u32 16, %s24
          %s218 = ssub.s32 1024, 1024
          %219 = vsyncadd %s212, %s218
          %s220 = smul.addr %s216, 64
          %s221 = scalar_lea.hbm %s1, %s220
          %s222 = sshll.u32 %s215, 4
          %s223 = int_to_ptr.vmem [resolvable:$true] %s222
          %228 = dma.hbm_to_vmem [thread:$0]  %s221, 1024, %s223, %s212, 64, 64, 4
        $region32: #{dfa_graph_encoder_forward.2} parent=23 // pred_fallthru
          _
      $region24: #{dfa_graph_encoder_forward.2} parent=5 // pred_fallthru
        _
      %p229 = scmp.le.s32.totalorder 1, %s16
      %p230 = scmp.lt.s32.totalorder %s16, 5
      %p231 = pnand %p229, %p230
      %p232 = pneg %p231
      // Predicated region
      $region33: #{dfa_graph_encoder_forward.2} parent=5 // pred_check
        _
      $region34: #{dfa_graph_encoder_forward.2} parent=5 // pred_check_branch
        %234 = sbr.rel (%p231) target = $region36
      $region35: #{dfa_graph_encoder_forward.2} parent=5 // pred_region
        %s235 = ssub.s32 %s16, 1
        %s236 = sand.u32 %s43, 1
        %s237 = scalar_lea.sflag [#allocation4], %s236
        %s238 = sand.u32 %s43, 1
        %s239 = smul.addr %s238, 64
        %s240 = scalar_lea.vmem [#allocation3], %s239
        // Predicated region
        $region37: #{dfa_graph_encoder_forward.2} parent=35 // pred_check
          %p241 = pneg %p56
        $region38: #{dfa_graph_encoder_forward.2} parent=35 // pred_check_branch
          %243 = sbr.rel (%p241) target = $region40
        $region39: #{dfa_graph_encoder_forward.2} parent=35 // pred_region
          %244 = dma.done %s237, 1024
        $region40: #{dfa_graph_encoder_forward.2} parent=35 // pred_fallthru
          _
        %s245 = sand.u32 %s21, 1
        %s246 = scalar_lea.sflag [#allocation6], %s245
        %s247 = sand.u32 %s69, 1
        %s248 = smul.addr %s247, 64
        %s249 = scalar_lea.vmem [#allocation5], %s248
        // Predicated region
        $region41: #{dfa_graph_encoder_forward.2} parent=35 // pred_check
          %p250 = pneg %p82
        $region42: #{dfa_graph_encoder_forward.2} parent=35 // pred_check_branch
          %252 = sbr.rel (%p250) target = $region44
        $region43: #{dfa_graph_encoder_forward.2} parent=35 // pred_region
          %253 = dma.done %s246, 1024
        $region44: #{dfa_graph_encoder_forward.2} parent=35 // pred_fallthru
          _
        // Predicated region
        $region45: #{dfa_graph_encoder_forward.2} parent=35 // pred_check
          %p254 = pneg %p103
        $region46: #{dfa_graph_encoder_forward.2} parent=35 // pred_check_branch
          %256 = sbr.rel (%p254) target = $region48
        $region47: #{dfa_graph_encoder_forward.2} parent=35 // pred_region
          %257 = dma.done [#allocation6], 1024
        $region48: #{dfa_graph_encoder_forward.2} parent=35 // pred_fallthru
          _
        %s258 = sand.u32 %s43, 1
        %s259 = scalar_lea.sflag [#allocation4], %s258
        %s260 = sand.u32 %s43, 1
        %s261 = smul.addr %s260, 64
        %s262 = scalar_lea.vmem [#allocation3], %s261
        %p263 = pneg %p56
        %p264 = pneg %p53
        %s265 = sand.u32 %s21, 1
        %s266 = scalar_lea.sflag [#allocation6], %s265
        %s267 = sand.u32 %s69, 1
        %s268 = smul.addr %s267, 64
        %s269 = scalar_lea.vmem [#allocation5], %s268
        %p270 = pneg %p82
        %p271 = pneg %p79
        %p272 = pneg %p103
        %p273 = pneg %p100
        %p274 = pneg %p124
        %p275 = pneg %p121
        %p276 = pneg %p150
        %p277 = pneg %p147
        %s278 = smul.u32 16, %s25
        %p279 = scmp.lt.s32.totalorder %s278, 31
        %s280 = scalar_select %p279, %s278, 31
        %s281 = smul.addr %s280, 4
        %s282 = scalar_lea.vmem %s4, %s281
        %s283 = smul.u32 16, %s25
        %s284 = smul.u32 16, %s26
        %s285 = smul.u32 16, %s25
        %p286 = scmp.lt.s32.totalorder %s285, 31
        %s287 = scalar_select %p286, %s285, 31
        %s288 = smul.addr %s287, 4
        %s289 = scalar_lea.vmem %s4, %s288
        %s290 = smul.u32 16, %s25
        %p292 = scmp.eq.s32.totalorder %s26, 0
        // Predicated region
        $region49: #{dfa_graph_encoder_forward.2} parent=35 // pred_check
          %p293 = pneg %p292
        $region50: #{dfa_graph_encoder_forward.2} parent=35 // pred_check_branch
          %295 = sbr.rel (%p293) target = $region52
        $region51: #{dfa_graph_encoder_forward.2} parent=35 // pred_region
          %296 = vst [vmem:[#allocation2] sm:$0xff] 0.0
          %297 = vst [vmem:[#allocation2 + $0x8] sm:$0xff] 0.0
          %298 = vst [vmem:[#allocation2 + $0x10] sm:$0xff] 0.0
          %299 = vst [vmem:[#allocation2 + $0x18] sm:$0xff] 0.0
          %300 = vst [vmem:[#allocation2 + $0x20] sm:$0xff] 0.0
          %301 = vst [vmem:[#allocation2 + $0x28] sm:$0xff] 0.0
          %302 = vst [vmem:[#allocation2 + $0x30] sm:$0xff] 0.0
          %303 = vst [vmem:[#allocation2 + $0x38] sm:$0xff] 0.0
          %304 = vst [vmem:[#allocation2 + $0x40] sm:$0xff] 0.0
          %305 = vst [vmem:[#allocation2 + $0x48] sm:$0xff] 0.0
          %306 = vst [vmem:[#allocation2 + $0x50] sm:$0xff] 0.0
          %307 = vst [vmem:[#allocation2 + $0x58] sm:$0xff] 0.0
          %308 = vst [vmem:[#allocation2 + $0x60] sm:$0xff] 0.0
          %309 = vst [vmem:[#allocation2 + $0x68] sm:$0xff] 0.0
          %310 = vst [vmem:[#allocation2 + $0x70] sm:$0xff] 0.0
          %311 = vst [vmem:[#allocation2 + $0x78] sm:$0xff] 0.0
        $region52: #{dfa_graph_encoder_forward.2} parent=35 // pred_fallthru
          _
        %v312 = vld [vmem:[#allocation2] sm:$0xff]
        %v313 = vld [vmem:[#allocation2 + $0x8] sm:$0xff]
        %v314 = vld [vmem:[#allocation2 + $0x10] sm:$0xff]
        %v315 = vld [vmem:[#allocation2 + $0x18] sm:$0xff]
        %v316 = vld [vmem:[#allocation2 + $0x20] sm:$0xff]
        %v317 = vld [vmem:[#allocation2 + $0x28] sm:$0xff]
        %v318 = vld [vmem:[#allocation2 + $0x30] sm:$0xff]
        %v319 = vld [vmem:[#allocation2 + $0x38] sm:$0xff]
        %v320 = vld [vmem:[#allocation2 + $0x40] sm:$0xff]
        %v321 = vld [vmem:[#allocation2 + $0x48] sm:$0xff]
        %v322 = vld [vmem:[#allocation2 + $0x50] sm:$0xff]
        %v323 = vld [vmem:[#allocation2 + $0x58] sm:$0xff]
        %v324 = vld [vmem:[#allocation2 + $0x60] sm:$0xff]
        %v325 = vld [vmem:[#allocation2 + $0x68] sm:$0xff]
        %v326 = vld [vmem:[#allocation2 + $0x70] sm:$0xff]
        %v327 = vld [vmem:[#allocation2 + $0x78] sm:$0xff]
        %v328 = vld [vmem:[%s240] sm:$0xf]
        %v329 = vld [vmem:[%s240 + $0x4] sm:$0xf]
        %v330 = vld [vmem:[%s240 + $0x8] sm:$0xf]
        %v331 = vld [vmem:[%s240 + $0xc] sm:$0xf]
        %v332 = vld [vmem:[%s240 + $0x10] sm:$0xf]
        %v333 = vld [vmem:[%s240 + $0x14] sm:$0xf]
        %v334 = vld [vmem:[%s240 + $0x18] sm:$0xf]
        %v335 = vld [vmem:[%s240 + $0x1c] sm:$0xf]
        %v336 = vld [vmem:[%s240 + $0x20] sm:$0xf]
        %v337 = vld [vmem:[%s240 + $0x24] sm:$0xf]
        %v338 = vld [vmem:[%s240 + $0x28] sm:$0xf]
        %v339 = vld [vmem:[%s240 + $0x2c] sm:$0xf]
        %v340 = vld [vmem:[%s240 + $0x30] sm:$0xf]
        %v341 = vld [vmem:[%s240 + $0x34] sm:$0xf]
        %v342 = vld [vmem:[%s240 + $0x38] sm:$0xf]
        %v343 = vld [vmem:[%s240 + $0x3c] sm:$0xf]
        %v344 = vld [vmem:[%s249] sm:$0xf]
        %v345 = vld [vmem:[%s249 + $0x4] sm:$0xf]
        %v346 = vld [vmem:[%s249 + $0x8] sm:$0xf]
        %v347 = vld [vmem:[%s249 + $0xc] sm:$0xf]
        %v348 = vld [vmem:[%s249 + $0x10] sm:$0xf]
        %v349 = vld [vmem:[%s249 + $0x14] sm:$0xf]
        %v350 = vld [vmem:[%s249 + $0x18] sm:$0xf]
        %v351 = vld [vmem:[%s249 + $0x1c] sm:$0xf]
        %v352 = vld [vmem:[%s249 + $0x20] sm:$0xf]
        %v353 = vld [vmem:[%s249 + $0x24] sm:$0xf]
        %v354 = vld [vmem:[%s249 + $0x28] sm:$0xf]
        %v355 = vld [vmem:[%s249 + $0x2c] sm:$0xf]
        %v356 = vld [vmem:[%s249 + $0x30] sm:$0xf]
        %v357 = vld [vmem:[%s249 + $0x34] sm:$0xf]
        %v358 = vld [vmem:[%s249 + $0x38] sm:$0xf]
        %v359 = vld [vmem:[%s249 + $0x3c] sm:$0xf]
        %v376 = vunpack.c.l.b16 %v328
        %v377 = vunpack.c.l.b16 %v329
        %v378 = vunpack.c.l.b16 %v330
        %v379 = vunpack.c.l.b16 %v331
        %v380 = vunpack.c.l.b16 %v332
        %v381 = vunpack.c.l.b16 %v333
        %v382 = vunpack.c.l.b16 %v334
        %v383 = vunpack.c.l.b16 %v335
        %v384 = vunpack.c.l.b16 %v336
        %v385 = vunpack.c.l.b16 %v337
        %v386 = vunpack.c.l.b16 %v338
        %v387 = vunpack.c.l.b16 %v339
        %v388 = vunpack.c.l.b16 %v340
        %v389 = vunpack.c.l.b16 %v341
        %v390 = vunpack.c.l.b16 %v342
        %v391 = vunpack.c.l.b16 %v343
        %v392 = vpack.c.b16 %v377, %v376
        %v393 = vpack.c.b16 %v379, %v378
        %v394 = vpack.c.b16 %v381, %v380
        %v395 = vpack.c.b16 %v383, %v382
        %v396 = vpack.c.b16 %v385, %v384
        %v397 = vpack.c.b16 %v387, %v386
        %v398 = vpack.c.b16 %v389, %v388
        %v399 = vpack.c.b16 %v391, %v390
        %v424 = vunpack.c.l.b16 %v344
        %v425 = vunpack.c.l.b16 %v345
        %v426 = vunpack.c.l.b16 %v346
        %v427 = vunpack.c.l.b16 %v347
        %v428 = vunpack.c.l.b16 %v348
        %v429 = vunpack.c.l.b16 %v349
        %v430 = vunpack.c.l.b16 %v350
        %v431 = vunpack.c.l.b16 %v351
        %v432 = vunpack.c.l.b16 %v352
        %v433 = vunpack.c.l.b16 %v353
        %v434 = vunpack.c.l.b16 %v354
        %v435 = vunpack.c.l.b16 %v355
        %v436 = vunpack.c.l.b16 %v356
        %v437 = vunpack.c.l.b16 %v357
        %v438 = vunpack.c.l.b16 %v358
        %v439 = vunpack.c.l.b16 %v359
        %v440 = vpack.c.b16 %v425, %v424
        %v441 = vpack.c.b16 %v427, %v426
        %v442 = vpack.c.b16 %v429, %v428
        %v443 = vpack.c.b16 %v431, %v430
        %v444 = vpack.c.b16 %v433, %v432
        %v445 = vpack.c.b16 %v435, %v434
        %v446 = vpack.c.b16 %v437, %v436
        %v447 = vpack.c.b16 %v439, %v438
        %456 = vmatprep.subr.bf16.mxu0 0
        %457 = vmatpush1.bf16.msra.mxu0 %v447
        %458 = vmatprep.subr.bf16.mxu0 0
        %459 = vmatpush1.bf16.msra.mxu0 %v446
        %460 = vmatprep.subr.bf16.mxu0 0
        %461 = vmatpush1.bf16.msra.mxu0 %v445
        %462 = vmatprep.subr.bf16.mxu0 0
        %463 = vmatpush1.bf16.msra.mxu0 %v444
        %464 = vmatprep.subr.bf16.mxu0 0
        %465 = vmatpush1.bf16.msra.mxu0 %v443
        %466 = vmatprep.subr.bf16.mxu0 0
        %467 = vmatpush1.bf16.msra.mxu0 %v442
        %468 = vmatprep.subr.bf16.mxu0 0
        %469 = vmatpush1.bf16.msra.mxu0 %v441
        %470 = vmatprep.subr.bf16.mxu0 0
        %471 = vmatpush1.bf16.msra.mxu0 %v440
        %472 = vmatprep.subr.bf16.mxu0 0
        %473 = vmatpush2.bf16.msra.mxu0 0
        %474 = vmatprep.subr.bf16.mxu0 0
        %475 = vmatpush2.bf16.msra.mxu0 0
        %476 = vmatprep.subr.bf16.mxu0 0
        %477 = vmatpush2.bf16.msra.mxu0 0
        %478 = vmatprep.subr.bf16.mxu0 0
        %479 = vmatpush2.bf16.msra.mxu0 0
        %480 = vmatprep.subr.bf16.mxu0 0
        %481 = vmatpush2.bf16.msra.mxu0 0
        %482 = vmatprep.subr.bf16.mxu0 0
        %483 = vmatpush2.bf16.msra.mxu0 0
        %484 = vmatprep.subr.bf16.mxu0 0
        %485 = vmatpush2.bf16.msra.mxu0 0
        %486 = vmatprep.subr.bf16.mxu0 0
        %487 = vmatpush2.bf16.msra.mxu0 0
        %488 = vmatprep.mubr.bf16.mxu0 0
        %489 = vmatmul.mubr.bf16.gmra.mxu0 %v392
        %v490 = vpop.f32.mrf.mxu0
        %v491 = vadd.f32 0.0, %v490
        %v492 = vpop.f32.mrf.mxu0
        %v493 = vpop.f32.mrf.mxu0
        %v494 = vadd.f32 0.0, %v493
        %v495 = vpop.f32.mrf.mxu0
        %496 = vmatprep.mubr.bf16.mxu0 0
        %497 = vmatmul.mubr.bf16.gmra.mxu0 %v393
        %v498 = vpop.f32.mrf.mxu0
        %v499 = vadd.f32 0.0, %v498
        %v500 = vpop.f32.mrf.mxu0
        %v501 = vpop.f32.mrf.mxu0
        %v502 = vadd.f32 0.0, %v501
        %v503 = vpop.f32.mrf.mxu0
        %504 = vmatprep.mubr.bf16.mxu0 0
        %505 = vmatmul.mubr.bf16.gmra.mxu0 %v394
        %v506 = vpop.f32.mrf.mxu0
        %v507 = vadd.f32 0.0, %v506
        %v508 = vpop.f32.mrf.mxu0
        %v509 = vpop.f32.mrf.mxu0
        %v510 = vadd.f32 0.0, %v509
        %v511 = vpop.f32.mrf.mxu0
        %512 = vmatprep.mubr.bf16.mxu0 0
        %513 = vmatmul.mubr.bf16.gmra.mxu0 %v395
        %v514 = vpop.f32.mrf.mxu0
        %v515 = vadd.f32 0.0, %v514
        %v516 = vpop.f32.mrf.mxu0
        %v517 = vpop.f32.mrf.mxu0
        %v518 = vadd.f32 0.0, %v517
        %v519 = vpop.f32.mrf.mxu0
        %520 = vmatprep.mubr.bf16.mxu0 0
        %521 = vmatmul.mubr.bf16.gmra.mxu0 %v396
        %v522 = vpop.f32.mrf.mxu0
        %v523 = vadd.f32 0.0, %v522
        %v524 = vpop.f32.mrf.mxu0
        %v525 = vpop.f32.mrf.mxu0
        %v526 = vadd.f32 0.0, %v525
        %v527 = vpop.f32.mrf.mxu0
        %528 = vmatprep.mubr.bf16.mxu0 0
        %529 = vmatmul.mubr.bf16.gmra.mxu0 %v397
        %v530 = vpop.f32.mrf.mxu0
        %v531 = vadd.f32 0.0, %v530
        %v532 = vpop.f32.mrf.mxu0
        %v533 = vpop.f32.mrf.mxu0
        %v534 = vadd.f32 0.0, %v533
        %v535 = vpop.f32.mrf.mxu0
        %536 = vmatprep.mubr.bf16.mxu0 0
        %537 = vmatmul.mubr.bf16.gmra.mxu0 %v398
        %v538 = vpop.f32.mrf.mxu0
        %v539 = vadd.f32 0.0, %v538
        %v540 = vpop.f32.mrf.mxu0
        %v541 = vpop.f32.mrf.mxu0
        %v542 = vadd.f32 0.0, %v541
        %v543 = vpop.f32.mrf.mxu0
        %544 = vmatprep.mubr.bf16.mxu0 0
        %545 = vmatmul.mubr.bf16.gmra.mxu0 %v399
        %v546 = vpop.f32.mrf.mxu0
        %v547 = vadd.f32 0.0, %v546
        %v548 = vpop.f32.mrf.mxu0
        %v549 = vpop.f32.mrf.mxu0
        %v550 = vadd.f32 0.0, %v549
        %v551 = vpop.f32.mrf.mxu0
        %552 = vdwg.mxu0
        %v553 = vadd.f32 %v312, %v491
        %v554 = vadd.f32 %v313, %v494
        %v555 = vadd.f32 %v314, %v499
        %v556 = vadd.f32 %v315, %v502
        %v557 = vadd.f32 %v316, %v507
        %v558 = vadd.f32 %v317, %v510
        %v559 = vadd.f32 %v318, %v515
        %v560 = vadd.f32 %v319, %v518
        %v561 = vadd.f32 %v320, %v523
        %v562 = vadd.f32 %v321, %v526
        %v563 = vadd.f32 %v322, %v531
        %v564 = vadd.f32 %v323, %v534
        %v565 = vadd.f32 %v324, %v539
        %v566 = vadd.f32 %v325, %v542
        %v567 = vadd.f32 %v326, %v547
        %v568 = vadd.f32 %v327, %v550
        %569 = vst [vmem:[#allocation2] sm:$0xff] %v553
        %570 = vst [vmem:[#allocation2 + $0x8] sm:$0xff] %v554
        %571 = vst [vmem:[#allocation2 + $0x10] sm:$0xff] %v555
        %572 = vst [vmem:[#allocation2 + $0x18] sm:$0xff] %v556
        %573 = vst [vmem:[#allocation2 + $0x20] sm:$0xff] %v557
        %574 = vst [vmem:[#allocation2 + $0x28] sm:$0xff] %v558
        %575 = vst [vmem:[#allocation2 + $0x30] sm:$0xff] %v559
        %576 = vst [vmem:[#allocation2 + $0x38] sm:$0xff] %v560
        %577 = vst [vmem:[#allocation2 + $0x40] sm:$0xff] %v561
        %578 = vst [vmem:[#allocation2 + $0x48] sm:$0xff] %v562
        %579 = vst [vmem:[#allocation2 + $0x50] sm:$0xff] %v563
        %580 = vst [vmem:[#allocation2 + $0x58] sm:$0xff] %v564
        %581 = vst [vmem:[#allocation2 + $0x60] sm:$0xff] %v565
        %582 = vst [vmem:[#allocation2 + $0x68] sm:$0xff] %v566
        %583 = vst [vmem:[#allocation2 + $0x70] sm:$0xff] %v567
        %584 = vst [vmem:[#allocation2 + $0x78] sm:$0xff] %v568
        %p585 = scmp.eq.s32.totalorder %s26, 1
        // Predicated region
        $region53: #{dfa_graph_encoder_forward.2} parent=35 // pred_check
          %p586 = pneg %p585
        $region54: #{dfa_graph_encoder_forward.2} parent=35 // pred_check_branch
          %588 = sbr.rel (%p586) target = $region56
        $region55: #{dfa_graph_encoder_forward.2} parent=35 // pred_region
          %v589 = vld [vmem:[#allocation2] sm:$0xff]
          %v590 = vld [vmem:[#allocation2 + $0x8] sm:$0xff]
          %v591 = vld [vmem:[#allocation2 + $0x10] sm:$0xff]
          %v592 = vld [vmem:[#allocation2 + $0x18] sm:$0xff]
          %v593 = vld [vmem:[#allocation2 + $0x20] sm:$0xff]
          %v594 = vld [vmem:[#allocation2 + $0x28] sm:$0xff]
          %v595 = vld [vmem:[#allocation2 + $0x30] sm:$0xff]
          %v596 = vld [vmem:[#allocation2 + $0x38] sm:$0xff]
          %v597 = vld [vmem:[#allocation2 + $0x40] sm:$0xff]
          %v598 = vld [vmem:[#allocation2 + $0x48] sm:$0xff]
          %v599 = vld [vmem:[#allocation2 + $0x50] sm:$0xff]
          %v600 = vld [vmem:[#allocation2 + $0x58] sm:$0xff]
          %v601 = vld [vmem:[#allocation2 + $0x60] sm:$0xff]
          %v602 = vld [vmem:[#allocation2 + $0x68] sm:$0xff]
          %v603 = vld [vmem:[#allocation2 + $0x70] sm:$0xff]
          %v604 = vld [vmem:[#allocation2 + $0x78] sm:$0xff]
          %v605 = vld [vmem:[#allocation7] sm:$0xf]
          %v606 = vld [vmem:[#allocation7 + $0x4] sm:$0xf]
          %v607 = vld [vmem:[#allocation7 + $0x8] sm:$0xf]
          %v608 = vld [vmem:[#allocation7 + $0xc] sm:$0xf]
          %v609 = vld [vmem:[#allocation7 + $0x10] sm:$0xf]
          %v610 = vld [vmem:[#allocation7 + $0x14] sm:$0xf]
          %v611 = vld [vmem:[#allocation7 + $0x18] sm:$0xf]
          %v612 = vld [vmem:[#allocation7 + $0x1c] sm:$0xf]
          %v613 = vld [vmem:[#allocation7 + $0x20] sm:$0xf]
          %v614 = vld [vmem:[#allocation7 + $0x24] sm:$0xf]
          %v615 = vld [vmem:[#allocation7 + $0x28] sm:$0xf]
          %v616 = vld [vmem:[#allocation7 + $0x2c] sm:$0xf]
          %v617 = vld [vmem:[#allocation7 + $0x30] sm:$0xf]
          %v618 = vld [vmem:[#allocation7 + $0x34] sm:$0xf]
          %v619 = vld [vmem:[#allocation7 + $0x38] sm:$0xf]
          %v620 = vld [vmem:[#allocation7 + $0x3c] sm:$0xf]
          %v621 = vunpack.c.l.bf16 %v605
          %v622 = vunpack.c.l.bf16 %v606
          %v623 = vunpack.c.l.bf16 %v607
          %v624 = vunpack.c.l.bf16 %v608
          %v625 = vunpack.c.l.bf16 %v609
          %v626 = vunpack.c.l.bf16 %v610
          %v627 = vunpack.c.l.bf16 %v611
          %v628 = vunpack.c.l.bf16 %v612
          %v629 = vunpack.c.l.bf16 %v613
          %v630 = vunpack.c.l.bf16 %v614
          %v631 = vunpack.c.l.bf16 %v615
          %v632 = vunpack.c.l.bf16 %v616
          %v633 = vunpack.c.l.bf16 %v617
          %v634 = vunpack.c.l.bf16 %v618
          %v635 = vunpack.c.l.bf16 %v619
          %v636 = vunpack.c.l.bf16 %v620
          %v637 = vld [vmem:[%s3] sm:$0x1]
          %v639 = vlaneseq
          %v640 = vshrl.u32 %v639, 7
          %v641 = vsub.s32 0, %v640
          %v642 = vrot.slane %v637, %v641
          %644 = vmatprep.subr.mxu0 0.0
          %645 = vmatpush1.msra.mxu0 %v636
          %646 = vmatprep.subr.mxu0 0.0
          %647 = vmatpush1.msra.mxu0 %v635
          %648 = vmatprep.subr.mxu0 0.0
          %649 = vmatpush1.msra.mxu0 %v634
          %650 = vmatprep.subr.mxu0 0.0
          %651 = vmatpush1.msra.mxu0 %v633
          %652 = vmatprep.subr.mxu0 0.0
          %653 = vmatpush1.msra.mxu0 %v632
          %654 = vmatprep.subr.mxu0 0.0
          %655 = vmatpush1.msra.mxu0 %v631
          %656 = vmatprep.subr.mxu0 0.0
          %657 = vmatpush1.msra.mxu0 %v630
          %658 = vmatprep.subr.mxu0 0.0
          %659 = vmatpush1.msra.mxu0 %v629
          %660 = vmatprep.subr.mxu0 0.0
          %661 = vmatpush1.msra.mxu0 %v628
          %662 = vmatprep.subr.mxu0 0.0
          %663 = vmatpush1.msra.mxu0 %v627
          %664 = vmatprep.subr.mxu0 0.0
          %665 = vmatpush1.msra.mxu0 %v626
          %666 = vmatprep.subr.mxu0 0.0
          %667 = vmatpush1.msra.mxu0 %v625
          %668 = vmatprep.subr.mxu0 0.0
          %669 = vmatpush1.msra.mxu0 %v624
          %670 = vmatprep.subr.mxu0 0.0
          %671 = vmatpush1.msra.mxu0 %v623
          %672 = vmatprep.subr.mxu0 0.0
          %673 = vmatpush1.msra.mxu0 %v622
          %674 = vmatprep.subr.mxu0 0.0
          %675 = vmatpush1.msra.mxu0 %v621
          %676 = vmatprep.subr.mxu0 0.0
          %677 = vmatpush2.msra.mxu0 0.0
          %678 = vmatprep.subr.mxu0 0.0
          %679 = vmatpush2.msra.mxu0 0.0
          %680 = vmatprep.subr.mxu0 0.0
          %681 = vmatpush2.msra.mxu0 0.0
          %682 = vmatprep.subr.mxu0 0.0
          %683 = vmatpush2.msra.mxu0 0.0
          %684 = vmatprep.subr.mxu0 0.0
          %685 = vmatpush2.msra.mxu0 0.0
          %686 = vmatprep.subr.mxu0 0.0
          %687 = vmatpush2.msra.mxu0 0.0
          %688 = vmatprep.subr.mxu0 0.0
          %689 = vmatpush2.msra.mxu0 0.0
          %690 = vmatprep.subr.mxu0 0.0
          %691 = vmatpush2.msra.mxu0 0.0
          %692 = vmatprep.subr.mxu0 0.0
          %693 = vmatpush2.msra.mxu0 0.0
          %694 = vmatprep.subr.mxu0 0.0
          %695 = vmatpush2.msra.mxu0 0.0
          %696 = vmatprep.subr.mxu0 0.0
          %697 = vmatpush2.msra.mxu0 0.0
          %698 = vmatprep.subr.mxu0 0.0
          %699 = vmatpush2.msra.mxu0 0.0
          %700 = vmatprep.subr.mxu0 0.0
          %701 = vmatpush2.msra.mxu0 0.0
          %702 = vmatprep.subr.mxu0 0.0
          %703 = vmatpush2.msra.mxu0 0.0
          %704 = vmatprep.subr.mxu0 0.0
          %705 = vmatpush2.msra.mxu0 0.0
          %706 = vmatprep.subr.mxu0 0.0
          %707 = vmatpush2.msra.mxu0 0.0
          %708 = vmatprep.mubr.f32.mxu0 0.0
          %709 = vmatmul.mubr.f32.gmra.mxu0 %v589
          %v710 = vpop.f32.mrf.mxu0
          %v711 = vadd.f32 %v642, %v710
          %v712 = vpop.f32.mrf.mxu0
          %713 = vmatprep.mubr.f32.mxu0 0.0
          %714 = vmatmul.mubr.f32.gmra.mxu0 %v590
          %v715 = vpop.f32.mrf.mxu0
          %v716 = vadd.f32 %v642, %v715
          %v717 = vpop.f32.mrf.mxu0
          %718 = vmatprep.mubr.f32.mxu0 0.0
          %719 = vmatmul.mubr.f32.gmra.mxu0 %v591
          %v720 = vpop.f32.mrf.mxu0
          %v721 = vadd.f32 %v642, %v720
          %v722 = vpop.f32.mrf.mxu0
          %723 = vmatprep.mubr.f32.mxu0 0.0
          %724 = vmatmul.mubr.f32.gmra.mxu0 %v592
          %v725 = vpop.f32.mrf.mxu0
          %v726 = vadd.f32 %v642, %v725
          %v727 = vpop.f32.mrf.mxu0
          %728 = vmatprep.mubr.f32.mxu0 0.0
          %729 = vmatmul.mubr.f32.gmra.mxu0 %v593
          %v730 = vpop.f32.mrf.mxu0
          %v731 = vadd.f32 %v642, %v730
          %v732 = vpop.f32.mrf.mxu0
          %733 = vmatprep.mubr.f32.mxu0 0.0
          %734 = vmatmul.mubr.f32.gmra.mxu0 %v594
          %v735 = vpop.f32.mrf.mxu0
          %v736 = vadd.f32 %v642, %v735
          %v737 = vpop.f32.mrf.mxu0
          %738 = vmatprep.mubr.f32.mxu0 0.0
          %739 = vmatmul.mubr.f32.gmra.mxu0 %v595
          %v740 = vpop.f32.mrf.mxu0
          %v741 = vadd.f32 %v642, %v740
          %v742 = vpop.f32.mrf.mxu0
          %743 = vmatprep.mubr.f32.mxu0 0.0
          %744 = vmatmul.mubr.f32.gmra.mxu0 %v596
          %v745 = vpop.f32.mrf.mxu0
          %v746 = vadd.f32 %v642, %v745
          %v747 = vpop.f32.mrf.mxu0
          %748 = vmatprep.mubr.f32.mxu0 0.0
          %749 = vmatmul.mubr.f32.gmra.mxu0 %v597
          %v750 = vpop.f32.mrf.mxu0
          %v751 = vadd.f32 %v642, %v750
          %v752 = vpop.f32.mrf.mxu0
          %753 = vmatprep.mubr.f32.mxu0 0.0
          %754 = vmatmul.mubr.f32.gmra.mxu0 %v598
          %v755 = vpop.f32.mrf.mxu0
          %v756 = vadd.f32 %v642, %v755
          %v757 = vpop.f32.mrf.mxu0
          %758 = vmatprep.mubr.f32.mxu0 0.0
          %759 = vmatmul.mubr.f32.gmra.mxu0 %v599
          %v760 = vpop.f32.mrf.mxu0
          %v761 = vadd.f32 %v642, %v760
          %v762 = vpop.f32.mrf.mxu0
          %763 = vmatprep.mubr.f32.mxu0 0.0
          %764 = vmatmul.mubr.f32.gmra.mxu0 %v600
          %v765 = vpop.f32.mrf.mxu0
          %v766 = vadd.f32 %v642, %v765
          %v767 = vpop.f32.mrf.mxu0
          %768 = vmatprep.mubr.f32.mxu0 0.0
          %769 = vmatmul.mubr.f32.gmra.mxu0 %v601
          %v770 = vpop.f32.mrf.mxu0
          %v771 = vadd.f32 %v642, %v770
          %v772 = vpop.f32.mrf.mxu0
          %773 = vmatprep.mubr.f32.mxu0 0.0
          %774 = vmatmul.mubr.f32.gmra.mxu0 %v602
          %v775 = vpop.f32.mrf.mxu0
          %v776 = vadd.f32 %v642, %v775
          %v777 = vpop.f32.mrf.mxu0
          %778 = vmatprep.mubr.f32.mxu0 0.0
          %779 = vmatmul.mubr.f32.gmra.mxu0 %v603
          %v780 = vpop.f32.mrf.mxu0
          %v781 = vadd.f32 %v642, %v780
          %v782 = vpop.f32.mrf.mxu0
          %783 = vmatprep.mubr.f32.mxu0 0.0
          %784 = vmatmul.mubr.f32.gmra.mxu0 %v604
          %v785 = vpop.f32.mrf.mxu0
          %v786 = vadd.f32 %v642, %v785
          %v787 = vpop.f32.mrf.mxu0
          %788 = vdwg.mxu0
          %v789 = vmax.f32 %v711, 0.0
          %v790 = vmax.f32 %v716, 0.0
          %v791 = vmax.f32 %v721, 0.0
          %v792 = vmax.f32 %v726, 0.0
          %v793 = vmax.f32 %v731, 0.0
          %v794 = vmax.f32 %v736, 0.0
          %v795 = vmax.f32 %v741, 0.0
          %v796 = vmax.f32 %v746, 0.0
          %v797 = vmax.f32 %v751, 0.0
          %v798 = vmax.f32 %v756, 0.0
          %v799 = vmax.f32 %v761, 0.0
          %v800 = vmax.f32 %v766, 0.0
          %v801 = vmax.f32 %v771, 0.0
          %v802 = vmax.f32 %v776, 0.0
          %v803 = vmax.f32 %v781, 0.0
          %v804 = vmax.f32 %v786, 0.0
          %v805 = vpack.c.bf16 %v790, %v789
          %v806 = vpack.c.bf16 %v792, %v791
          %v807 = vpack.c.bf16 %v794, %v793
          %v808 = vpack.c.bf16 %v796, %v795
          %v809 = vpack.c.bf16 %v798, %v797
          %v810 = vpack.c.bf16 %v800, %v799
          %v811 = vpack.c.bf16 %v802, %v801
          %v812 = vpack.c.bf16 %v804, %v803
          %v821 = vunpack.c.l.b16 %v805
          %v822 = vunpack.c.h.b16 %v805
          %v823 = vunpack.c.l.b16 %v806
          %v824 = vunpack.c.h.b16 %v806
          %v825 = vunpack.c.l.b16 %v807
          %v826 = vunpack.c.h.b16 %v807
          %v827 = vunpack.c.l.b16 %v808
          %v828 = vunpack.c.h.b16 %v808
          %v829 = vunpack.c.l.b16 %v809
          %v830 = vunpack.c.h.b16 %v809
          %v831 = vunpack.c.l.b16 %v810
          %v832 = vunpack.c.h.b16 %v810
          %v833 = vunpack.c.l.b16 %v811
          %v834 = vunpack.c.h.b16 %v811
          %v835 = vunpack.c.l.b16 %v812
          %v836 = vunpack.c.h.b16 %v812
          %v837 = vpack.c.b16 %v821, %v821
          %v838 = vpack.c.b16 %v822, %v822
          %v839 = vpack.c.b16 %v823, %v823
          %v840 = vpack.c.b16 %v824, %v824
          %v841 = vpack.c.b16 %v825, %v825
          %v842 = vpack.c.b16 %v826, %v826
          %v843 = vpack.c.b16 %v827, %v827
          %v844 = vpack.c.b16 %v828, %v828
          %v845 = vpack.c.b16 %v829, %v829
          %v846 = vpack.c.b16 %v830, %v830
          %v847 = vpack.c.b16 %v831, %v831
          %v848 = vpack.c.b16 %v832, %v832
          %v849 = vpack.c.b16 %v833, %v833
          %v850 = vpack.c.b16 %v834, %v834
          %v851 = vpack.c.b16 %v835, %v835
          %v852 = vpack.c.b16 %v836, %v836
          %869 = vst [vmem:[%s289] sm:$0xf] %v837
          %870 = vst [vmem:[%s289 + $0x4] sm:$0xf] %v838
          %871 = vst [vmem:[%s289 + $0x8] sm:$0xf] %v839
          %872 = vst [vmem:[%s289 + $0xc] sm:$0xf] %v840
          %873 = vst [vmem:[%s289 + $0x10] sm:$0xf] %v841
          %874 = vst [vmem:[%s289 + $0x14] sm:$0xf] %v842
          %875 = vst [vmem:[%s289 + $0x18] sm:$0xf] %v843
          %876 = vst [vmem:[%s289 + $0x1c] sm:$0xf] %v844
          %877 = vst [vmem:[%s289 + $0x20] sm:$0xf] %v845
          %878 = vst [vmem:[%s289 + $0x24] sm:$0xf] %v846
          %879 = vst [vmem:[%s289 + $0x28] sm:$0xf] %v847
          %880 = vst [vmem:[%s289 + $0x2c] sm:$0xf] %v848
          %881 = vst [vmem:[%s289 + $0x30] sm:$0xf] %v849
          %882 = vst [vmem:[%s289 + $0x34] sm:$0xf] %v850
          %883 = vst [vmem:[%s289 + $0x38] sm:$0xf] %v851
          %884 = vst [vmem:[%s289 + $0x3c] sm:$0xf] %v852
        $region56: #{dfa_graph_encoder_forward.2} parent=35 // pred_fallthru
          _
        %s885 = smul.u32 16, %s25
        %p886 = scmp.lt.s32.totalorder %s885, 31
        %s887 = scalar_select %p886, %s885, 31
        %s888 = smul.addr %s887, 4
        %s889 = scalar_lea.vmem %s4, %s888
        // Predicated region
        $region57: #{dfa_graph_encoder_forward.2} parent=35 // pred_check
          %p890 = pneg %p147
        $region58: #{dfa_graph_encoder_forward.2} parent=35 // pred_check_branch
          %892 = sbr.rel (%p890) target = $region60
        $region59: #{dfa_graph_encoder_forward.2} parent=35 // pred_region
          %s893 = smul.u32 16, %s25
        $region60: #{dfa_graph_encoder_forward.2} parent=35 // pred_fallthru
          _
      $region36: #{dfa_graph_encoder_forward.2} parent=5 // pred_fallthru
        _
      %p894 = scmp.le.s32.totalorder 2, %s16
      // Predicated region
      $region61: #{dfa_graph_encoder_forward.2} parent=5 // pred_check
        %p895 = pneg %p894
      $region62: #{dfa_graph_encoder_forward.2} parent=5 // pred_check_branch
        %897 = sbr.rel (%p895) target = $region64
      $region63: #{dfa_graph_encoder_forward.2} parent=5 // pred_region
        %s898 = ssub.s32 %s16, 2
        // Predicated region
        $region65: #{dfa_graph_encoder_forward.2} parent=63 // pred_check
          %p899 = pneg %p153
        $region66: #{dfa_graph_encoder_forward.2} parent=63 // pred_check_branch
          %901 = sbr.rel (%p899) target = $region68
        $region67: #{dfa_graph_encoder_forward.2} parent=63 // pred_region
          %s902 = smul.u32 16, %s27
          %p903 = scmp.lt.s32.totalorder %s902, 31
          %s904 = scalar_select %p903, %s902, 31
          %s905 = smul.addr %s904, 4
          %s906 = scalar_lea.vmem %s4, %s905
        $region68: #{dfa_graph_encoder_forward.2} parent=63 // pred_fallthru
          _
      $region64: #{dfa_graph_encoder_forward.2} parent=5 // pred_fallthru
        _
    $region6: #{dfa_graph_encoder_forward.2} parent=1 // loop_footer
      %s20 = sadd.s32 1, %s16
    $region7: #{dfa_graph_encoder_forward.2} parent=1 // loop_footer_branch
      %15 = sbr.rel target = $region3
    $region8: #{dfa_graph_encoder_forward.2} parent=1 // loop_exit
      _
    %907 = vsyncpa [#allocation4], 1
    %s908 = scalar_lea.sflag [#allocation4], 1
    %909 = vsyncpa %s908, 1
    %910 = vsyncpa [#allocation6], 1
    %s911 = scalar_lea.sflag [#allocation6], 1
    %912 = vsyncpa %s911, 1

</llo_original>
